<compile_context>
chip_gen: v5e
topology: v5e:2x2
jax: 0.10.0
libtpu: 0.0.40
codegen_flags: <defaults>
</compile_context>

<pallas_src>
import jax
import jax.numpy as jnp
from jax.experimental import pallas as pl
from jax.experimental.pallas import tpu as pltpu


# ----------------------------------------------------------------------------
# Fused UpBlock kernel (one batch element per grid step; everything in VMEM)
# ----------------------------------------------------------------------------
def _up_block_kernel(x_ref, mid_ref, apw_ref, bpw_ref, ry_ref, ax_ref,
                     tm_ref, tx_ref, b1_ref, t2_ref, b2_ref, o_ref):
    f32 = jnp.float32
    bf16 = jnp.bfloat16

    # 1) 1x1 pw conv on the LOW-RES input (commuted ahead of the upsample).
    #    x_ref: (H, W*Cin), apw: block-diag kron(I_W, Wpw^T) -> (H, W*P).
    pw = jnp.dot(x_ref[...], apw_ref[...], preferred_element_type=f32)
    pw = pw + bpw_ref[...]

    # 2) bilinear x2 upsample (align_corners=True) as two tiny separable matmuls
    #    on VMEM-resident data: rows via Ry, columns via kron(Rx, I_P)^T.
    up = jnp.dot(ry_ref[...], pw, preferred_element_type=f32)        # (H2, W*P)
    up = jnp.dot(up, ax_ref[...], preferred_element_type=f32)        # (H2, W2*P)

    # 3) conv1 3x3 (valid) + folded BN + ReLU.  cat([mid, x_up]) is replaced by
    #    a weight split: banded mid-channel taps + banded x-channel taps
    #    accumulated into one f32 accumulator (bf16 MXU inputs, f32 epilogue).
    n_rows = mid_ref.shape[0]              # H2
    h1 = n_rows - 2                        # H1 = H2 - 2
    acc1 = jnp.zeros((h1, tm_ref.shape[2]), f32)
    for dy in range(3):
        acc1 += jnp.dot(mid_ref[dy:dy + h1, :].astype(bf16), tm_ref[dy],
                        preferred_element_type=f32)
        acc1 += jnp.dot(up[dy:dy + h1, :].astype(bf16), tx_ref[dy],
                        preferred_element_type=f32)
    a1 = jnp.maximum(acc1 + b1_ref[...], 0.0)                        # (H1, W1*P)

    # 4) conv2 3x3 (valid) + folded BN + ReLU.
    hout = h1 - 2
    acc2 = jnp.zeros((hout, t2_ref.shape[2]), f32)
    for dy in range(3):
        acc2 += jnp.dot(a1[dy:dy + hout, :].astype(bf16), t2_ref[dy],
                        preferred_element_type=f32)
    o_ref[...] = jnp.maximum(acc2 + b2_ref[...], 0.0).astype(o_ref.dtype)


# ----------------------------------------------------------------------------
# Wrapper-side weight packing (tiny, done once per call at trace time)
# ----------------------------------------------------------------------------
def _interp_matrix(in_size, out_size):
    """1-D bilinear interp weights matching F.interpolate(align_corners=True)."""
    out_idx = jnp.arange(out_size, dtype=jnp.float32)
    src = out_idx * (in_size - 1) / (out_size - 1)
    i0 = jnp.clip(jnp.floor(src).astype(jnp.int32), 0, in_size - 1)
    i1 = jnp.clip(i0 + 1, 0, in_size - 1)
    w1 = src - i0.astype(jnp.float32)
    w0 = 1.0 - w1
    rows = jnp.arange(out_size, dtype=jnp.int32)
    r = jnp.zeros((out_size, in_size), jnp.float32)
    r = r.at[rows, i0].add(w0)
    r = r.at[rows, i1].add(w1)
    return r                                           # rows sum to 1


def _fold_bn(w, gamma, beta, mean, var, eps=1e-5):
    s = gamma / jnp.sqrt(var + eps)
    return w * s[:, None, None, None], beta - mean * s


def _band_taps(w_eff, w_in, w_out):
    """Per-dy banded matrices for a 3x3 valid conv on (w, c)-interleaved columns.

    w_eff: (C_out, C_in, 3, 3) BN-folded conv weight.
    Returns (3, w_in*C_in, w_out*C_out):  acting on rows laid out as columns
    (w*C_in + c_in) and producing columns (w*C_out + c_out).
    """
    c_out, c_in, kh, kw = w_eff.shape
    taps = []
    for dy in range(kh):
        t = jnp.zeros((w_in * c_in, w_out * c_out), jnp.float32)
        for dx in range(kw):
            t = t + jnp.kron(jnp.eye(w_in, w_out, k=-dx, dtype=jnp.float32),
                             w_eff[:, :, dy, dx].T)
        taps.append(t)
    return jnp.stack(taps)


def _pack_params(params, H, W, Cin, Cmid, P):
    H2, W2 = 2 * H, 2 * W
    W1 = W2 - 2
    Wout = W1 - 2
    # 1x1 pw conv (with bias), block-diagonal over (w, c)-interleaved columns.
    wpw = params["pw_w"].reshape(P, Cin).T                           # (Cin, P)
    a_pw = jnp.kron(jnp.eye(W, dtype=jnp.float32), wpw)              # (W*Cin, W*P)
    b_pw = jnp.tile(params["pw_b"], W)[None, :]                      # (1, W*P)
    # bilinear x2 (align_corners=True), separable interp matrices.
    ry = _interp_matrix(H, H2)                                       # (H2, H)
    rx = _interp_matrix(W, W2)                                       # (W2, W)
    a_x = jnp.kron(rx, jnp.eye(P, dtype=jnp.float32)).T              # (W*P, W2*P)
    # conv1: fold BN, split weights into mid-channel and x-channel banded taps.
    w1_eff, b1_eff = _fold_bn(params["c1_w"], params["bn1_g"], params["bn1_b"],
                              params["bn1_m"], params["bn1_v"])
    t_mid = _band_taps(w1_eff[:, :Cmid], W2, W1).astype(jnp.bfloat16)  # (3, W2*Cmid, W1*P)
    t_x = _band_taps(w1_eff[:, Cmid:], W2, W1).astype(jnp.bfloat16)    # (3, W2*P,   W1*P)
    b1 = jnp.tile(b1_eff, W1)[None, :]                               # (1, W1*P)
    # conv2: fold BN.
    w2_eff, b2_eff = _fold_bn(params["c2_w"], params["bn2_g"], params["bn2_b"],
                              params["bn2_m"], params["bn2_v"])
    t2 = _band_taps(w2_eff, W1, Wout).astype(jnp.bfloat16)           # (3, W1*P, Wout*P)
    b2 = jnp.tile(b2_eff, Wout)[None, :]                             # (1, Wout*P)
    return (a_pw, b_pw, ry, a_x, t_mid, t_x, b1, t2, b2)


# ----------------------------------------------------------------------------
# UpBlock forward (mode='interpolation', padding=False)
# ----------------------------------------------------------------------------
@jax.jit
def up_block_forward(params, x_nchw, mid_nchw):
    N, Cin, H, W = x_nchw.shape
    P = params["pw_w"].shape[0]
    Cmid = mid_nchw.shape[1]
    H2, W2 = 2 * H, 2 * W
    H1, W1 = H2 - 2, W2 - 2
    Hout, Wout = H1 - 2, W1 - 2
    assert params["c1_w"].shape[1] == Cmid + P

    # The only boundary relayouts: NCHW -> (rows = h, cols = w*C + c) slabs.
    x2d = x_nchw.transpose(0, 2, 3, 1).reshape(N, H, W * Cin)
    sy = (mid_nchw.shape[2] - H2) // 2
    sx = (mid_nchw.shape[3] - W2) // 2
    mid2d = (mid_nchw[:, :, sy:sy + H2, sx:sx + W2]
             .transpose(0, 2, 3, 1).reshape(N, H2, W2 * Cmid))

    packed = _pack_params(params, H, W, Cin, Cmid, P)
    a_pw, b_pw, ry, a_x, t_mid, t_x, b1, t2, b2 = packed

    def full(arr):
        nd = arr.ndim
        return pl.BlockSpec(arr.shape, lambda n, _nd=nd: (0,) * _nd)

    flops = 2 * N * (
        H * a_pw.shape[0] * a_pw.shape[1]
        + H2 * H * a_pw.shape[1]
        + H2 * a_x.shape[0] * a_x.shape[1]
        + 3 * H1 * (t_mid.shape[1] * t_mid.shape[2] + t_x.shape[1] * t_x.shape[2])
        + 3 * Hout * t2.shape[1] * t2.shape[2])
    bytes_accessed = int(
        x2d.size * 4 + mid2d.size * 4 + N * Hout * Wout * P * 4
        + sum(int(t.size) * t.dtype.itemsize for t in packed))

    out2d = pl.pallas_call(
        _up_block_kernel,
        grid=(N,),
        in_specs=[
            pl.BlockSpec((None, H, W * Cin), lambda n: (n, 0, 0)),
            pl.BlockSpec((None, H2, W2 * Cmid), lambda n: (n, 0, 0)),
            full(a_pw), full(b_pw), full(ry), full(a_x),
            full(t_mid), full(t_x), full(b1), full(t2), full(b2),
        ],
        out_specs=pl.BlockSpec((None, Hout, Wout * P), lambda n: (n, 0, 0)),
        out_shape=jax.ShapeDtypeStruct((N, Hout, Wout * P), jnp.float32),
        compiler_params=pltpu.CompilerParams(
            dimension_semantics=("parallel",),          # 2 TCs on v7x split batch
            vmem_limit_bytes=32 * 1024 * 1024),         # fits v7x's 64 MiB VMEM
        cost_estimate=pl.CostEstimate(flops=flops, transcendentals=0,
                                      bytes_accessed=bytes_accessed),
    )(x2d, mid2d, *packed)

    # Exit boundary relayout back to the PyTorch-facing NCHW contract.
    return out2d.reshape(N, Hout, Wout, P).transpose(0, 3, 1, 2)


# ----------------------------------------------------------------------------
# Deterministic example parameters / run
# ----------------------------------------------------------------------------
def init_params(key, in_planes, planes):
    ks = jax.random.split(key, 3)
    p = {
        "pw_w": 0.1 * jax.random.normal(ks[0], (planes, in_planes, 1, 1), jnp.float32),
        "pw_b": 0.01 * jnp.arange(planes, dtype=jnp.float32),
        "c1_w": 0.1 * jax.random.normal(ks[1], (planes, in_planes, 3, 3), jnp.float32),
        "c2_w": 0.1 * jax.random.normal(ks[2], (planes, planes, 3, 3), jnp.float32),
    }
    for i in (1, 2):
        p[f"bn{i}_g"] = 1.0 + 0.05 * jnp.arange(planes, dtype=jnp.float32)
        p[f"bn{i}_b"] = 0.02 * jnp.arange(planes, dtype=jnp.float32)
        p[f"bn{i}_m"] = 0.01 * jnp.arange(planes, dtype=jnp.float32)
        p[f"bn{i}_v"] = 1.0 + 0.1 * jnp.arange(planes, dtype=jnp.float32)
    return p


if __name__ == "__main__":
    in_planes, planes = 8, 4
    key = jax.random.PRNGKey(0)
    kx, kmid, kp = jax.random.split(key, 3)
    x = jax.random.normal(kx, (2, in_planes, 8, 8), jnp.float32)                # NCHW
    mid = jax.random.normal(kmid, (2, in_planes - planes, 20, 20), jnp.float32)  # NCHW
    params = init_params(kp, in_planes, planes)

    out = up_block_forward(params, x, mid)
    out = jax.block_until_ready(out)
    assert out.shape == (2, planes, 12, 12), out.shape
    assert bool(jnp.all(jnp.isfinite(out))), "non-finite output"
    print("KERNEL_OK")
</pallas_src>

<mosaic_0001>
module attributes {stable_mosaic.version = 11 : i64} {
  func.func @_up_block_kernel(%arg0: i32, %arg1: memref<1x8x64xf32, #tpu.memory_space<vmem>>, %arg2: memref<1x16x64xf32, #tpu.memory_space<vmem>>, %arg3: memref<64x32xf32, #tpu.memory_space<vmem>>, %arg4: memref<1x32xf32, #tpu.memory_space<vmem>>, %arg5: memref<16x8xf32, #tpu.memory_space<vmem>>, %arg6: memref<32x64xf32, #tpu.memory_space<vmem>>, %arg7: memref<3x64x56xbf16, #tpu.memory_space<vmem>>, %arg8: memref<3x64x56xbf16, #tpu.memory_space<vmem>>, %arg9: memref<1x56xf32, #tpu.memory_space<vmem>>, %arg10: memref<3x56x48xbf16, #tpu.memory_space<vmem>>, %arg11: memref<1x48xf32, #tpu.memory_space<vmem>>, %arg12: memref<1x12x48xf32, #tpu.memory_space<vmem>>) attributes {dimension_semantics = [#tpu.dimension_semantics<parallel>], iteration_bounds = array<i64: 2>, scalar_prefetch = 0 : i64, scratch_operands = 0 : i64, tpu.core_type = #tpu.core_type<tc>, window_params = [{transform_indices = @transform_0, window_bounds = array<i64: 1, 8, 64>}, {transform_indices = @transform_1, window_bounds = array<i64: 1, 16, 64>}, {pipeline_mode = #tpu.pipeline_mode<synchronous>, transform_indices = @transform_2, window_bounds = array<i64: 64, 32>}, {pipeline_mode = #tpu.pipeline_mode<synchronous>, transform_indices = @transform_3, window_bounds = array<i64: 1, 32>}, {pipeline_mode = #tpu.pipeline_mode<synchronous>, transform_indices = @transform_4, window_bounds = array<i64: 16, 8>}, {pipeline_mode = #tpu.pipeline_mode<synchronous>, transform_indices = @transform_5, window_bounds = array<i64: 32, 64>}, {pipeline_mode = #tpu.pipeline_mode<synchronous>, transform_indices = @transform_6, window_bounds = array<i64: 3, 64, 56>}, {pipeline_mode = #tpu.pipeline_mode<synchronous>, transform_indices = @transform_7, window_bounds = array<i64: 3, 64, 56>}, {pipeline_mode = #tpu.pipeline_mode<synchronous>, transform_indices = @transform_8, window_bounds = array<i64: 1, 56>}, {pipeline_mode = #tpu.pipeline_mode<synchronous>, transform_indices = @transform_9, window_bounds = array<i64: 3, 56, 48>}, {pipeline_mode = #tpu.pipeline_mode<synchronous>, transform_indices = @transform_10, window_bounds = array<i64: 1, 48>}, {transform_indices = @transform_11, window_bounds = array<i64: 1, 12, 48>}]} {
    %c0 = arith.constant 0 : index
    %c0_0 = arith.constant 0 : index
    %c0_1 = arith.constant 0 : index
    %0 = vector.load %arg1[%c0, %c0_0, %c0_1] : memref<1x8x64xf32, #tpu.memory_space<vmem>>, vector<1x8x64xf32>
    %1 = vector.shape_cast %0 : vector<1x8x64xf32> to vector<8x64xf32>
    %c0_2 = arith.constant 0 : index
    %c0_3 = arith.constant 0 : index
    %2 = vector.load %arg3[%c0_2, %c0_3] : memref<64x32xf32, #tpu.memory_space<vmem>>, vector<64x32xf32>
    %cst = arith.constant dense<0.000000e+00> : vector<8x32xf32>
    %3 = tpu.matmul %1, %2, %cst {dimension_numbers = #tpu.dot_dimension_numbers<[1], [0], [0], [1], [0, 0, 1, 1], [], []>} : vector<8x64xf32>, vector<64x32xf32>, vector<8x32xf32> -> vector<8x32xf32>
    %c0_4 = arith.constant 0 : index
    %c0_5 = arith.constant 0 : index
    %4 = vector.load %arg4[%c0_4, %c0_5] : memref<1x32xf32, #tpu.memory_space<vmem>>, vector<1x32xf32>
    %5 = vector.broadcast %4 : vector<1x32xf32> to vector<8x32xf32>
    %6 = arith.addf %3, %5 : vector<8x32xf32>
    %c0_6 = arith.constant 0 : index
    %c0_7 = arith.constant 0 : index
    %7 = vector.load %arg5[%c0_6, %c0_7] : memref<16x8xf32, #tpu.memory_space<vmem>>, vector<16x8xf32>
    %cst_8 = arith.constant dense<0.000000e+00> : vector<16x32xf32>
    %8 = tpu.matmul %7, %6, %cst_8 {dimension_numbers = #tpu.dot_dimension_numbers<[1], [0], [0], [1], [0, 0, 1, 1], [], []>} : vector<16x8xf32>, vector<8x32xf32>, vector<16x32xf32> -> vector<16x32xf32>
    %c0_9 = arith.constant 0 : index
    %c0_10 = arith.constant 0 : index
    %9 = vector.load %arg6[%c0_9, %c0_10] : memref<32x64xf32, #tpu.memory_space<vmem>>, vector<32x64xf32>
    %cst_11 = arith.constant dense<0.000000e+00> : vector<16x64xf32>
    %10 = tpu.matmul %8, %9, %cst_11 {dimension_numbers = #tpu.dot_dimension_numbers<[1], [0], [0], [1], [0, 0, 1, 1], [], []>} : vector<16x32xf32>, vector<32x64xf32>, vector<16x64xf32> -> vector<16x64xf32>
    %cst_12 = arith.constant 0.000000e+00 : f32
    %11 = vector.broadcast %cst_12 : f32 to vector<14x56xf32>
    %c0_13 = arith.constant 0 : index
    %c0_14 = arith.constant 0 : index
    %c0_15 = arith.constant 0 : index
    %12 = vector.load %arg2[%c0_13, %c0_14, %c0_15] : memref<1x16x64xf32, #tpu.memory_space<vmem>>, vector<1x14x64xf32>
    %13 = vector.shape_cast %12 : vector<1x14x64xf32> to vector<14x64xf32>
    %14 = arith.truncf %13 : vector<14x64xf32> to vector<14x64xbf16>
    %c0_16 = arith.constant 0 : index
    %c0_17 = arith.constant 0 : index
    %c0_18 = arith.constant 0 : index
    %15 = vector.load %arg7[%c0_16, %c0_17, %c0_18] : memref<3x64x56xbf16, #tpu.memory_space<vmem>>, vector<1x64x56xbf16>
    %16 = vector.shape_cast %15 : vector<1x64x56xbf16> to vector<64x56xbf16>
    %cst_19 = arith.constant dense<0.000000e+00> : vector<14x56xf32>
    %17 = tpu.matmul %14, %16, %cst_19 {dimension_numbers = #tpu.dot_dimension_numbers<[1], [0], [0], [1], [0, 0, 1, 1], [], []>} : vector<14x64xbf16>, vector<64x56xbf16>, vector<14x56xf32> -> vector<14x56xf32>
    %18 = arith.addf %11, %17 : vector<14x56xf32>
    %19 = vector.extract_strided_slice %10 {offsets = [0, 0], sizes = [14, 64], strides = [1, 1]} : vector<16x64xf32> to vector<14x64xf32>
    %20 = arith.truncf %19 : vector<14x64xf32> to vector<14x64xbf16>
    %c0_20 = arith.constant 0 : index
    %c0_21 = arith.constant 0 : index
    %c0_22 = arith.constant 0 : index
    %21 = vector.load %arg8[%c0_20, %c0_21, %c0_22] : memref<3x64x56xbf16, #tpu.memory_space<vmem>>, vector<1x64x56xbf16>
    %22 = vector.shape_cast %21 : vector<1x64x56xbf16> to vector<64x56xbf16>
    %cst_23 = arith.constant dense<0.000000e+00> : vector<14x56xf32>
    %23 = tpu.matmul %20, %22, %cst_23 {dimension_numbers = #tpu.dot_dimension_numbers<[1], [0], [0], [1], [0, 0, 1, 1], [], []>} : vector<14x64xbf16>, vector<64x56xbf16>, vector<14x56xf32> -> vector<14x56xf32>
    %24 = arith.addf %18, %23 : vector<14x56xf32>
    %c0_24 = arith.constant 0 : index
    %c1 = arith.constant 1 : index
    %c0_25 = arith.constant 0 : index
    %25 = vector.load %arg2[%c0_24, %c1, %c0_25] : memref<1x16x64xf32, #tpu.memory_space<vmem>>, vector<1x14x64xf32>
    %26 = vector.shape_cast %25 : vector<1x14x64xf32> to vector<14x64xf32>
    %27 = arith.truncf %26 : vector<14x64xf32> to vector<14x64xbf16>
    %c1_26 = arith.constant 1 : index
    %c0_27 = arith.constant 0 : index
    %c0_28 = arith.constant 0 : index
    %28 = vector.load %arg7[%c1_26, %c0_27, %c0_28] : memref<3x64x56xbf16, #tpu.memory_space<vmem>>, vector<1x64x56xbf16>
    %29 = vector.shape_cast %28 : vector<1x64x56xbf16> to vector<64x56xbf16>
    %cst_29 = arith.constant dense<0.000000e+00> : vector<14x56xf32>
    %30 = tpu.matmul %27, %29, %cst_29 {dimension_numbers = #tpu.dot_dimension_numbers<[1], [0], [0], [1], [0, 0, 1, 1], [], []>} : vector<14x64xbf16>, vector<64x56xbf16>, vector<14x56xf32> -> vector<14x56xf32>
    %31 = arith.addf %24, %30 : vector<14x56xf32>
    %32 = vector.extract_strided_slice %10 {offsets = [1, 0], sizes = [14, 64], strides = [1, 1]} : vector<16x64xf32> to vector<14x64xf32>
    %33 = arith.truncf %32 : vector<14x64xf32> to vector<14x64xbf16>
    %c1_30 = arith.constant 1 : index
    %c0_31 = arith.constant 0 : index
    %c0_32 = arith.constant 0 : index
    %34 = vector.load %arg8[%c1_30, %c0_31, %c0_32] : memref<3x64x56xbf16, #tpu.memory_space<vmem>>, vector<1x64x56xbf16>
    %35 = vector.shape_cast %34 : vector<1x64x56xbf16> to vector<64x56xbf16>
    %cst_33 = arith.constant dense<0.000000e+00> : vector<14x56xf32>
    %36 = tpu.matmul %33, %35, %cst_33 {dimension_numbers = #tpu.dot_dimension_numbers<[1], [0], [0], [1], [0, 0, 1, 1], [], []>} : vector<14x64xbf16>, vector<64x56xbf16>, vector<14x56xf32> -> vector<14x56xf32>
    %37 = arith.addf %31, %36 : vector<14x56xf32>
    %c0_34 = arith.constant 0 : index
    %c2 = arith.constant 2 : index
    %c0_35 = arith.constant 0 : index
    %38 = vector.load %arg2[%c0_34, %c2, %c0_35] : memref<1x16x64xf32, #tpu.memory_space<vmem>>, vector<1x14x64xf32>
    %39 = vector.shape_cast %38 : vector<1x14x64xf32> to vector<14x64xf32>
    %40 = arith.truncf %39 : vector<14x64xf32> to vector<14x64xbf16>
    %c2_36 = arith.constant 2 : index
    %c0_37 = arith.constant 0 : index
    %c0_38 = arith.constant 0 : index
    %41 = vector.load %arg7[%c2_36, %c0_37, %c0_38] : memref<3x64x56xbf16, #tpu.memory_space<vmem>>, vector<1x64x56xbf16>
    %42 = vector.shape_cast %41 : vector<1x64x56xbf16> to vector<64x56xbf16>
    %cst_39 = arith.constant dense<0.000000e+00> : vector<14x56xf32>
    %43 = tpu.matmul %40, %42, %cst_39 {dimension_numbers = #tpu.dot_dimension_numbers<[1], [0], [0], [1], [0, 0, 1, 1], [], []>} : vector<14x64xbf16>, vector<64x56xbf16>, vector<14x56xf32> -> vector<14x56xf32>
    %44 = arith.addf %37, %43 : vector<14x56xf32>
    %45 = vector.extract_strided_slice %10 {offsets = [2, 0], sizes = [14, 64], strides = [1, 1]} : vector<16x64xf32> to vector<14x64xf32>
    %46 = arith.truncf %45 : vector<14x64xf32> to vector<14x64xbf16>
    %c2_40 = arith.constant 2 : index
    %c0_41 = arith.constant 0 : index
    %c0_42 = arith.constant 0 : index
    %47 = vector.load %arg8[%c2_40, %c0_41, %c0_42] : memref<3x64x56xbf16, #tpu.memory_space<vmem>>, vector<1x64x56xbf16>
    %48 = vector.shape_cast %47 : vector<1x64x56xbf16> to vector<64x56xbf16>
    %cst_43 = arith.constant dense<0.000000e+00> : vector<14x56xf32>
    %49 = tpu.matmul %46, %48, %cst_43 {dimension_numbers = #tpu.dot_dimension_numbers<[1], [0], [0], [1], [0, 0, 1, 1], [], []>} : vector<14x64xbf16>, vector<64x56xbf16>, vector<14x56xf32> -> vector<14x56xf32>
    %50 = arith.addf %44, %49 : vector<14x56xf32>
    %c0_44 = arith.constant 0 : index
    %c0_45 = arith.constant 0 : index
    %51 = vector.load %arg9[%c0_44, %c0_45] : memref<1x56xf32, #tpu.memory_space<vmem>>, vector<1x56xf32>
    %52 = vector.broadcast %51 : vector<1x56xf32> to vector<14x56xf32>
    %53 = arith.addf %50, %52 : vector<14x56xf32>
    %cst_46 = arith.constant 0.000000e+00 : f32
    %54 = vector.broadcast %cst_46 : f32 to vector<14x56xf32>
    %55 = arith.maximumf %53, %54 : vector<14x56xf32>
    %cst_47 = arith.constant 0.000000e+00 : f32
    %56 = vector.broadcast %cst_47 : f32 to vector<12x48xf32>
    %57 = vector.extract_strided_slice %55 {offsets = [0, 0], sizes = [12, 56], strides = [1, 1]} : vector<14x56xf32> to vector<12x56xf32>
    %58 = arith.truncf %57 : vector<12x56xf32> to vector<12x56xbf16>
    %c0_48 = arith.constant 0 : index
    %c0_49 = arith.constant 0 : index
    %c0_50 = arith.constant 0 : index
    %59 = vector.load %arg10[%c0_48, %c0_49, %c0_50] : memref<3x56x48xbf16, #tpu.memory_space<vmem>>, vector<1x56x48xbf16>
    %60 = vector.shape_cast %59 : vector<1x56x48xbf16> to vector<56x48xbf16>
    %cst_51 = arith.constant dense<0.000000e+00> : vector<12x48xf32>
    %61 = tpu.matmul %58, %60, %cst_51 {dimension_numbers = #tpu.dot_dimension_numbers<[1], [0], [0], [1], [0, 0, 1, 1], [], []>} : vector<12x56xbf16>, vector<56x48xbf16>, vector<12x48xf32> -> vector<12x48xf32>
    %62 = arith.addf %56, %61 : vector<12x48xf32>
    %63 = vector.extract_strided_slice %55 {offsets = [1, 0], sizes = [12, 56], strides = [1, 1]} : vector<14x56xf32> to vector<12x56xf32>
    %64 = arith.truncf %63 : vector<12x56xf32> to vector<12x56xbf16>
    %c1_52 = arith.constant 1 : index
    %c0_53 = arith.constant 0 : index
    %c0_54 = arith.constant 0 : index
    %65 = vector.load %arg10[%c1_52, %c0_53, %c0_54] : memref<3x56x48xbf16, #tpu.memory_space<vmem>>, vector<1x56x48xbf16>
    %66 = vector.shape_cast %65 : vector<1x56x48xbf16> to vector<56x48xbf16>
    %cst_55 = arith.constant dense<0.000000e+00> : vector<12x48xf32>
    %67 = tpu.matmul %64, %66, %cst_55 {dimension_numbers = #tpu.dot_dimension_numbers<[1], [0], [0], [1], [0, 0, 1, 1], [], []>} : vector<12x56xbf16>, vector<56x48xbf16>, vector<12x48xf32> -> vector<12x48xf32>
    %68 = arith.addf %62, %67 : vector<12x48xf32>
    %69 = vector.extract_strided_slice %55 {offsets = [2, 0], sizes = [12, 56], strides = [1, 1]} : vector<14x56xf32> to vector<12x56xf32>
    %70 = arith.truncf %69 : vector<12x56xf32> to vector<12x56xbf16>
    %c2_56 = arith.constant 2 : index
    %c0_57 = arith.constant 0 : index
    %c0_58 = arith.constant 0 : index
    %71 = vector.load %arg10[%c2_56, %c0_57, %c0_58] : memref<3x56x48xbf16, #tpu.memory_space<vmem>>, vector<1x56x48xbf16>
    %72 = vector.shape_cast %71 : vector<1x56x48xbf16> to vector<56x48xbf16>
    %cst_59 = arith.constant dense<0.000000e+00> : vector<12x48xf32>
    %73 = tpu.matmul %70, %72, %cst_59 {dimension_numbers = #tpu.dot_dimension_numbers<[1], [0], [0], [1], [0, 0, 1, 1], [], []>} : vector<12x56xbf16>, vector<56x48xbf16>, vector<12x48xf32> -> vector<12x48xf32>
    %74 = arith.addf %68, %73 : vector<12x48xf32>
    %c0_60 = arith.constant 0 : index
    %c0_61 = arith.constant 0 : index
    %75 = vector.load %arg11[%c0_60, %c0_61] : memref<1x48xf32, #tpu.memory_space<vmem>>, vector<1x48xf32>
    %76 = vector.broadcast %75 : vector<1x48xf32> to vector<12x48xf32>
    %77 = arith.addf %74, %76 : vector<12x48xf32>
    %cst_62 = arith.constant 0.000000e+00 : f32
    %78 = vector.broadcast %cst_62 : f32 to vector<12x48xf32>
    %79 = arith.maximumf %77, %78 : vector<12x48xf32>
    %c0_63 = arith.constant 0 : index
    %c0_64 = arith.constant 0 : index
    %c0_65 = arith.constant 0 : index
    %80 = vector.load %arg12[%c0_63, %c0_64, %c0_65] : memref<1x12x48xf32, #tpu.memory_space<vmem>>, vector<1x12x48xf32>
    %81 = vector.shape_cast %80 : vector<1x12x48xf32> to vector<12x48xf32>
    %82 = vector.shape_cast %79 : vector<12x48xf32> to vector<1x12x48xf32>
    tpu.vector_store %arg12[%c0_63, %c0_64, %c0_65], %82 {strides = array<i32>} : memref<1x12x48xf32, #tpu.memory_space<vmem>>, vector<1x12x48xf32>,
    return
  }
  func.func @transform_0(%arg0: i32) -> (i32, i32, i32) {
    %c0_i32 = arith.constant 0 : i32
    %c0_i32_0 = arith.constant 0 : i32
    %c0_i32_1 = arith.constant 0 : i32
    return %arg0, %c0_i32, %c0_i32_0 : i32, i32, i32
  }
  func.func @transform_1(%arg0: i32) -> (i32, i32, i32) {
    %c0_i32 = arith.constant 0 : i32
    %c0_i32_0 = arith.constant 0 : i32
    %c0_i32_1 = arith.constant 0 : i32
    return %arg0, %c0_i32, %c0_i32_0 : i32, i32, i32
  }
  func.func @transform_2(%arg0: i32) -> (i32, i32) {
    %c0_i32 = arith.constant 0 : i32
    %c0_i32_0 = arith.constant 0 : i32
    %c0_i32_1 = arith.constant 0 : i32
    return %c0_i32, %c0_i32_0 : i32, i32
  }
  func.func @transform_3(%arg0: i32) -> (i32, i32) {
    %c0_i32 = arith.constant 0 : i32
    %c0_i32_0 = arith.constant 0 : i32
    %c0_i32_1 = arith.constant 0 : i32
    return %c0_i32, %c0_i32_0 : i32, i32
  }
  func.func @transform_4(%arg0: i32) -> (i32, i32) {
    %c0_i32 = arith.constant 0 : i32
    %c0_i32_0 = arith.constant 0 : i32
    %c0_i32_1 = arith.constant 0 : i32
    return %c0_i32, %c0_i32_0 : i32, i32
  }
  func.func @transform_5(%arg0: i32) -> (i32, i32) {
    %c0_i32 = arith.constant 0 : i32
    %c0_i32_0 = arith.constant 0 : i32
    %c0_i32_1 = arith.constant 0 : i32
    return %c0_i32, %c0_i32_0 : i32, i32
  }
  func.func @transform_6(%arg0: i32) -> (i32, i32, i32) {
    %c0_i32 = arith.constant 0 : i32
    %c0_i32_0 = arith.constant 0 : i32
    %c0_i32_1 = arith.constant 0 : i32
    %c0_i32_2 = arith.constant 0 : i32
    return %c0_i32, %c0_i32_0, %c0_i32_1 : i32, i32, i32
  }
  func.func @transform_7(%arg0: i32) -> (i32, i32, i32) {
    %c0_i32 = arith.constant 0 : i32
    %c0_i32_0 = arith.constant 0 : i32
    %c0_i32_1 = arith.constant 0 : i32
    %c0_i32_2 = arith.constant 0 : i32
    return %c0_i32, %c0_i32_0, %c0_i32_1 : i32, i32, i32
  }
  func.func @transform_8(%arg0: i32) -> (i32, i32) {
    %c0_i32 = arith.constant 0 : i32
    %c0_i32_0 = arith.constant 0 : i32
    %c0_i32_1 = arith.constant 0 : i32
    return %c0_i32, %c0_i32_0 : i32, i32
  }
  func.func @transform_9(%arg0: i32) -> (i32, i32, i32) {
    %c0_i32 = arith.constant 0 : i32
    %c0_i32_0 = arith.constant 0 : i32
    %c0_i32_1 = arith.constant 0 : i32
    %c0_i32_2 = arith.constant 0 : i32
    return %c0_i32, %c0_i32_0, %c0_i32_1 : i32, i32, i32
  }
  func.func @transform_10(%arg0: i32) -> (i32, i32) {
    %c0_i32 = arith.constant 0 : i32
    %c0_i32_0 = arith.constant 0 : i32
    %c0_i32_1 = arith.constant 0 : i32
    return %c0_i32, %c0_i32_0 : i32, i32
  }
  func.func @transform_11(%arg0: i32) -> (i32, i32, i32) {
    %c0_i32 = arith.constant 0 : i32
    %c0_i32_0 = arith.constant 0 : i32
    %c0_i32_1 = arith.constant 0 : i32
    return %arg0, %c0_i32, %c0_i32_0 : i32, i32, i32
  }
}

</mosaic_0001>

<llo_original>
// kernel: tile.23
$region0: #{tile.23}
  #allocation0 [shape = 's32[1]{0}', space=sflag, size = 0x4, scoped, tag = 'scoped memory for tile.23']
  %s0 = inlined_call_operand.vmem [shape: f32[4], index: 0, kind: input, shape index: {}]
  %s1 = inlined_call_operand.vmem [shape: f32[14,4], index: 1, kind: output, shape index: {}]
  // Predicated region
  $region2: #{tile.23} parent=0 // pred_check
    _
  $region3: #{tile.23} parent=0 // pred_check_branch
    %3 = sbr.rel (0) target = $region5
  $region4: #{tile.23} parent=0 // pred_region
    _
  $region5: #{tile.23} parent=0 // pred_fallthru
    _
  %v4 = vld [vmem:[%s0] ss:$0 sm:$0xff]
  %5 = vst [vmem:[%s1] sm:$0xff] %v4
  %s6 = scalar_lea.vmem %s1, 8
  %7 = vst [vmem:[%s6] sm:$0xff] %v4

// kernel: tile.24
$region0: #{tile.24}
  %s0 = inlined_call_operand.vmem [shape: f32[14,4], index: 0, kind: input, shape index: {}]
  %s1 = inlined_call_operand.vmem [shape: f32[1,56], index: 1, kind: output, shape index: {}]
  $region1: #{tile.24} parent=0
    #allocation0 [shape = 'u8[4096]{0}', space=vmem, size = 0x1000, scoped, tag = 'scoped mem for output reshape']
    %v2 = vld [vmem:[%s0] sm:$0x1]
    %vm3 = vcmask 31744
    %4 = vst.msk [vmem:[#allocation0] sm:$0x1] %vm3, %v2
    %s5 = scalar_lea.vmem %s0, 13
    %v6 = vld [vmem:[%s5] sm:$0x1]
    %7 = vrot.lane.b32.xlu0 %v6, 52
    %v8 = vpop.permute.xlu0 %7
    %vm9 = vcmask 458144
    %10 = vst.msk [vmem:[#allocation0] sm:$0x1] %vm9, %v8
    %s11 = scalar_lea.vmem %s0, 12
    %v12 = vld [vmem:[%s11] sm:$0x1]
    %13 = vrot.lane.b32.xlu0 %v12, 48
    %v14 = vpop.permute.xlu0 %13
    %vm15 = vcmask 425344
    %16 = vst.msk [vmem:[#allocation0] sm:$0x1] %vm15, %v14
    %s17 = scalar_lea.vmem %s0, 11
    %v18 = vld [vmem:[%s17] sm:$0x1]
    %19 = vrot.lane.b32.xlu0 %v18, 44
    %v20 = vpop.permute.xlu0 %19
    %vm21 = vcmask 392544
    %22 = vst.msk [vmem:[#allocation0] sm:$0x1] %vm21, %v20
    %s23 = scalar_lea.vmem %s0, 10
    %v24 = vld [vmem:[%s23] sm:$0x1]
    %25 = vrot.lane.b32.xlu0 %v24, 40
    %v26 = vpop.permute.xlu0 %25
    %vm27 = vcmask 359744
    %28 = vst.msk [vmem:[#allocation0] sm:$0x1] %vm27, %v26
    %s29 = scalar_lea.vmem %s0, 9
    %v30 = vld [vmem:[%s29] sm:$0x1]
    %31 = vrot.lane.b32.xlu0 %v30, 36
    %v32 = vpop.permute.xlu0 %31
    %vm33 = vcmask 326944
    %34 = vst.msk [vmem:[#allocation0] sm:$0x1] %vm33, %v32
    %s35 = scalar_lea.vmem %s0, 8
    %v36 = vld [vmem:[%s35] sm:$0x1]
    %37 = vrot.lane.b32.xlu0 %v36, 32
    %v38 = vpop.permute.xlu0 %37
    %vm39 = vcmask 294144
    %40 = vst.msk [vmem:[#allocation0] sm:$0x1] %vm39, %v38
    %s41 = scalar_lea.vmem %s0, 7
    %v42 = vld [vmem:[%s41] sm:$0x1]
    %43 = vrot.lane.b32.xlu0 %v42, 28
    %v44 = vpop.permute.xlu0 %43
    %vm45 = vcmask 261344
    %46 = vst.msk [vmem:[#allocation0] sm:$0x1] %vm45, %v44
    %s47 = scalar_lea.vmem %s0, 6
    %v48 = vld [vmem:[%s47] sm:$0x1]
    %49 = vrot.lane.b32.xlu0 %v48, 24
    %v50 = vpop.permute.xlu0 %49
    %vm51 = vcmask 228544
    %52 = vst.msk [vmem:[#allocation0] sm:$0x1] %vm51, %v50
    %s53 = scalar_lea.vmem %s0, 5
    %v54 = vld [vmem:[%s53] sm:$0x1]
    %55 = vrot.lane.b32.xlu0 %v54, 20
    %v56 = vpop.permute.xlu0 %55
    %vm57 = vcmask 195744
    %58 = vst.msk [vmem:[#allocation0] sm:$0x1] %vm57, %v56
    %s59 = scalar_lea.vmem %s0, 4
    %v60 = vld [vmem:[%s59] sm:$0x1]
    %61 = vrot.lane.b32.xlu0 %v60, 16
    %v62 = vpop.permute.xlu0 %61
    %vm63 = vcmask 162944
    %64 = vst.msk [vmem:[#allocation0] sm:$0x1] %vm63, %v62
    %s65 = scalar_lea.vmem %s0, 3
    %v66 = vld [vmem:[%s65] sm:$0x1]
    %67 = vrot.lane.b32.xlu0 %v66, 12
    %v68 = vpop.permute.xlu0 %67
    %vm69 = vcmask 130144
    %70 = vst.msk [vmem:[#allocation0] sm:$0x1] %vm69, %v68
    %s71 = scalar_lea.vmem %s0, 2
    %v72 = vld [vmem:[%s71] sm:$0x1]
    %73 = vrot.lane.b32.xlu0 %v72, 8
    %v74 = vpop.permute.xlu0 %73
    %vm75 = vcmask 97344
    %76 = vst.msk [vmem:[#allocation0] sm:$0x1] %vm75, %v74
    %s77 = scalar_lea.vmem %s0, 1
    %v78 = vld [vmem:[%s77] sm:$0x1]
    %79 = vrot.lane.b32.xlu0 %v78, 4
    %v80 = vpop.permute.xlu0 %79
    %vm81 = vcmask 64544
    %82 = vst.msk [vmem:[#allocation0] sm:$0x1] %vm81, %v80
    %s84 = ssub.s32 2, 1
    %v85 = vld [vmem:[#allocation0] sm:%s84]
    %s87 = ssub.s32 2, 1
    %88 = vst [vmem:[%s1] sm:%s87] %v85

// kernel: tile.28
$region0: #{tile.28}
  #allocation0 [shape = 's32[1]{0}', space=sflag, size = 0x4, scoped, tag = 'scoped memory for tile.28']
  %s0 = inlined_call_operand.vmem [shape: f32[4], index: 0, kind: input, shape index: {}]
  %s1 = inlined_call_operand.vmem [shape: f32[12,4], index: 1, kind: output, shape index: {}]
  // Predicated region
  $region2: #{tile.28} parent=0 // pred_check
    _
  $region3: #{tile.28} parent=0 // pred_check_branch
    %3 = sbr.rel (0) target = $region5
  $region4: #{tile.28} parent=0 // pred_region
    _
  $region5: #{tile.28} parent=0 // pred_fallthru
    _
  %v4 = vld [vmem:[%s0] ss:$0 sm:$0xff]
  %5 = vst [vmem:[%s1] sm:$0xff] %v4
  %s6 = scalar_lea.vmem %s1, 8
  %7 = vst [vmem:[%s6] sm:$0xff] %v4

// kernel: tile.29
$region0: #{tile.29}
  %s0 = inlined_call_operand.vmem [shape: f32[12,4], index: 0, kind: input, shape index: {}]
  %s1 = inlined_call_operand.vmem [shape: f32[1,48], index: 1, kind: output, shape index: {}]
  $region1: #{tile.29} parent=0
    #allocation0 [shape = 'u8[4096]{0}', space=vmem, size = 0x1000, scoped, tag = 'scoped mem for output reshape']
    %v2 = vld [vmem:[%s0] sm:$0x1]
    %vm3 = vcmask 31744
    %4 = vst.msk [vmem:[#allocation0] sm:$0x1] %vm3, %v2
    %s5 = scalar_lea.vmem %s0, 11
    %v6 = vld [vmem:[%s5] sm:$0x1]
    %7 = vrot.lane.b32.xlu0 %v6, 44
    %v8 = vpop.permute.xlu0 %7
    %vm9 = vcmask 392544
    %10 = vst.msk [vmem:[#allocation0] sm:$0x1] %vm9, %v8
    %s11 = scalar_lea.vmem %s0, 10
    %v12 = vld [vmem:[%s11] sm:$0x1]
    %13 = vrot.lane.b32.xlu0 %v12, 40
    %v14 = vpop.permute.xlu0 %13
    %vm15 = vcmask 359744
    %16 = vst.msk [vmem:[#allocation0] sm:$0x1] %vm15, %v14
    %s17 = scalar_lea.vmem %s0, 9
    %v18 = vld [vmem:[%s17] sm:$0x1]
    %19 = vrot.lane.b32.xlu0 %v18, 36
    %v20 = vpop.permute.xlu0 %19
    %vm21 = vcmask 326944
    %22 = vst.msk [vmem:[#allocation0] sm:$0x1] %vm21, %v20
    %s23 = scalar_lea.vmem %s0, 8
    %v24 = vld [vmem:[%s23] sm:$0x1]
    %25 = vrot.lane.b32.xlu0 %v24, 32
    %v26 = vpop.permute.xlu0 %25
    %vm27 = vcmask 294144
    %28 = vst.msk [vmem:[#allocation0] sm:$0x1] %vm27, %v26
    %s29 = scalar_lea.vmem %s0, 7
    %v30 = vld [vmem:[%s29] sm:$0x1]
    %31 = vrot.lane.b32.xlu0 %v30, 28
    %v32 = vpop.permute.xlu0 %31
    %vm33 = vcmask 261344
    %34 = vst.msk [vmem:[#allocation0] sm:$0x1] %vm33, %v32
    %s35 = scalar_lea.vmem %s0, 6
    %v36 = vld [vmem:[%s35] sm:$0x1]
    %37 = vrot.lane.b32.xlu0 %v36, 24
    %v38 = vpop.permute.xlu0 %37
    %vm39 = vcmask 228544
    %40 = vst.msk [vmem:[#allocation0] sm:$0x1] %vm39, %v38
    %s41 = scalar_lea.vmem %s0, 5
    %v42 = vld [vmem:[%s41] sm:$0x1]
    %43 = vrot.lane.b32.xlu0 %v42, 20
    %v44 = vpop.permute.xlu0 %43
    %vm45 = vcmask 195744
    %46 = vst.msk [vmem:[#allocation0] sm:$0x1] %vm45, %v44
    %s47 = scalar_lea.vmem %s0, 4
    %v48 = vld [vmem:[%s47] sm:$0x1]
    %49 = vrot.lane.b32.xlu0 %v48, 16
    %v50 = vpop.permute.xlu0 %49
    %vm51 = vcmask 162944
    %52 = vst.msk [vmem:[#allocation0] sm:$0x1] %vm51, %v50
    %s53 = scalar_lea.vmem %s0, 3
    %v54 = vld [vmem:[%s53] sm:$0x1]
    %55 = vrot.lane.b32.xlu0 %v54, 12
    %v56 = vpop.permute.xlu0 %55
    %vm57 = vcmask 130144
    %58 = vst.msk [vmem:[#allocation0] sm:$0x1] %vm57, %v56
    %s59 = scalar_lea.vmem %s0, 2
    %v60 = vld [vmem:[%s59] sm:$0x1]
    %61 = vrot.lane.b32.xlu0 %v60, 8
    %v62 = vpop.permute.xlu0 %61
    %vm63 = vcmask 97344
    %64 = vst.msk [vmem:[#allocation0] sm:$0x1] %vm63, %v62
    %s65 = scalar_lea.vmem %s0, 1
    %v66 = vld [vmem:[%s65] sm:$0x1]
    %67 = vrot.lane.b32.xlu0 %v66, 4
    %v68 = vpop.permute.xlu0 %67
    %vm69 = vcmask 64544
    %70 = vst.msk [vmem:[#allocation0] sm:$0x1] %vm69, %v68
    %s72 = ssub.s32 2, 1
    %v73 = vld [vmem:[#allocation0] sm:%s72]
    %s75 = ssub.s32 2, 1
    %76 = vst [vmem:[%s1] sm:%s75] %v73

// kernel: tile.18
$region0: #{tile.18}
  #allocation0 [shape = 's32[1]{0}', space=sflag, size = 0x4, scoped, tag = 'scoped memory for tile.18']
  %s0 = inlined_call_operand.vmem [shape: f32[4], index: 0, kind: input, shape index: {}]
  %s1 = inlined_call_operand.vmem [shape: f32[8,4], index: 1, kind: output, shape index: {}]
  // Predicated region
  $region2: #{tile.18} parent=0 // pred_check
    _
  $region3: #{tile.18} parent=0 // pred_check_branch
    %3 = sbr.rel (0) target = $region5
  $region4: #{tile.18} parent=0 // pred_region
    _
  $region5: #{tile.18} parent=0 // pred_fallthru
    _
  %v4 = vld [vmem:[%s0] ss:$0 sm:$0xff]
  %5 = vst [vmem:[%s1] sm:$0xff] %v4

// kernel: tile.19
$region0: #{tile.19}
  %s0 = inlined_call_operand.vmem [shape: f32[8,4], index: 0, kind: input, shape index: {}]
  %s1 = inlined_call_operand.vmem [shape: f32[1,32], index: 1, kind: output, shape index: {}]
  $region1: #{tile.19} parent=0
    #allocation0 [shape = 'u8[4096]{0}', space=vmem, size = 0x1000, scoped, tag = 'scoped mem for output reshape']
    %v2 = vld [vmem:[%s0] sm:$0x1]
    %vm3 = vcmask 31744
    %4 = vst.msk [vmem:[#allocation0] sm:$0x1] %vm3, %v2
    %s5 = scalar_lea.vmem %s0, 7
    %v6 = vld [vmem:[%s5] sm:$0x1]
    %7 = vrot.lane.b32.xlu0 %v6, 28
    %v8 = vpop.permute.xlu0 %7
    %vm9 = vcmask 261344
    %10 = vst.msk [vmem:[#allocation0] sm:$0x1] %vm9, %v8
    %s11 = scalar_lea.vmem %s0, 6
    %v12 = vld [vmem:[%s11] sm:$0x1]
    %13 = vrot.lane.b32.xlu0 %v12, 24
    %v14 = vpop.permute.xlu0 %13
    %vm15 = vcmask 228544
    %16 = vst.msk [vmem:[#allocation0] sm:$0x1] %vm15, %v14
    %s17 = scalar_lea.vmem %s0, 5
    %v18 = vld [vmem:[%s17] sm:$0x1]
    %19 = vrot.lane.b32.xlu0 %v18, 20
    %v20 = vpop.permute.xlu0 %19
    %vm21 = vcmask 195744
    %22 = vst.msk [vmem:[#allocation0] sm:$0x1] %vm21, %v20
    %s23 = scalar_lea.vmem %s0, 4
    %v24 = vld [vmem:[%s23] sm:$0x1]
    %25 = vrot.lane.b32.xlu0 %v24, 16
    %v26 = vpop.permute.xlu0 %25
    %vm27 = vcmask 162944
    %28 = vst.msk [vmem:[#allocation0] sm:$0x1] %vm27, %v26
    %s29 = scalar_lea.vmem %s0, 3
    %v30 = vld [vmem:[%s29] sm:$0x1]
    %31 = vrot.lane.b32.xlu0 %v30, 12
    %v32 = vpop.permute.xlu0 %31
    %vm33 = vcmask 130144
    %34 = vst.msk [vmem:[#allocation0] sm:$0x1] %vm33, %v32
    %s35 = scalar_lea.vmem %s0, 2
    %v36 = vld [vmem:[%s35] sm:$0x1]
    %37 = vrot.lane.b32.xlu0 %v36, 8
    %v38 = vpop.permute.xlu0 %37
    %vm39 = vcmask 97344
    %40 = vst.msk [vmem:[#allocation0] sm:$0x1] %vm39, %v38
    %s41 = scalar_lea.vmem %s0, 1
    %v42 = vld [vmem:[%s41] sm:$0x1]
    %43 = vrot.lane.b32.xlu0 %v42, 4
    %v44 = vpop.permute.xlu0 %43
    %vm45 = vcmask 64544
    %46 = vst.msk [vmem:[#allocation0] sm:$0x1] %vm45, %v44
    %s48 = ssub.s32 2, 1
    %v49 = vld [vmem:[#allocation0] sm:%s48]
    %s51 = ssub.s32 2, 1
    %52 = vst [vmem:[%s1] sm:%s51] %v49

// kernel: up_block_forward.1
$region0: #{up_block_forward.1}
  #allocation0 [shape = 'u32[]', space=smem, size = 0x4, offset = 0x4, fixed_abs, tag = 'smem constant byte address 0x4 - core index']
  #allocation1 [shape = 'u32[72,128]{1,0:T(1,128)}', space=vmem, size = 0x9000, scoped, tag = 'internal scratch']
  %s0 = inlined_call_operand.vmem [shape: f32[2,8,64], index: 0, kind: input, shape index: {}]
  %s1 = inlined_call_operand.vmem [shape: f32[2,16,64], index: 1, kind: input, shape index: {}]
  %s2 = inlined_call_operand.vmem [shape: f32[64,32], index: 2, kind: input, shape index: {}]
  %s3 = inlined_call_operand.vmem [shape: f32[1,32], index: 3, kind: input, shape index: {}]
  %s4 = inlined_call_operand.vmem [shape: f32[16,8], index: 4, kind: input, shape index: {}]
  %s5 = inlined_call_operand.vmem [shape: f32[32,64], index: 5, kind: input, shape index: {}]
  %s6 = inlined_call_operand.vmem [shape: bf16[3,64,56], index: 6, kind: input, shape index: {}]
  %s7 = inlined_call_operand.vmem [shape: bf16[3,64,56], index: 7, kind: input, shape index: {}]
  %s8 = inlined_call_operand.vmem [shape: f32[1,56], index: 8, kind: input, shape index: {}]
  %s9 = inlined_call_operand.vmem [shape: bf16[3,56,48], index: 9, kind: input, shape index: {}]
  %s10 = inlined_call_operand.vmem [shape: f32[1,48], index: 10, kind: input, shape index: {}]
  %s11 = inlined_call_operand.vmem [shape: f32[2,12,48], index: 11, kind: output, shape index: {}]
  %s12 = sld [smem:[#allocation0]]
  $region77: #{up_block_forward.1} parent=0
    _
  %s14 = ssub.s32 1, %s12
  %s15 = scalar_select 0, %s14, %s12
  loop: start=0, step=1, limit=4
  $region2: #{up_block_forward.1} parent=0 // loop_pre_header
    _
  $region3: #{up_block_forward.1} parent=0 // loop_header
    %s17 = sphi 0, %s21
    %p18 = scmp.ge.s32.totalorder %s17, 4
    %s27 = sphi 0, %s29
    %s30 = sphi 0, %s27
    %s31 = sphi 0, %s30
    %s47 = sphi 0, %s31
    %s53 = sphi 0, %s55
    %s56 = sphi 0, %s53
    %s57 = sphi 0, %s56
    %s73 = sphi 0, %s57
    %s77 = sphi 0, %s77
    %s79 = sphi 0, %s77
    %s80 = sphi 0, %s79
    %s94 = sphi 0, %s80
    %s98 = sphi 0, %s98
    %s100 = sphi 0, %s98
    %s101 = sphi 0, %s100
    %s115 = sphi 0, %s101
    %s119 = sphi 0, %s119
    %s121 = sphi 0, %s119
    %s122 = sphi 0, %s121
    %s136 = sphi 0, %s122
    %s140 = sphi 0, %s140
    %s142 = sphi 0, %s140
    %s143 = sphi 0, %s142
    %s157 = sphi 0, %s143
    %s161 = sphi 0, %s161
    %s163 = sphi 0, %s161
    %s164 = sphi 0, %s163
    %s178 = sphi 0, %s164
    %s182 = sphi 0, %s182
    %s184 = sphi 0, %s182
    %s185 = sphi 0, %s184
    %s199 = sphi 0, %s185
    %s203 = sphi 0, %s203
    %s205 = sphi 0, %s203
    %s206 = sphi 0, %s205
    %s220 = sphi 0, %s206
    %s224 = sphi 0, %s224
    %s226 = sphi 0, %s224
    %s227 = sphi 0, %s226
    %s241 = sphi 0, %s227
    %s245 = sphi 0, %s245
    %s247 = sphi 0, %s245
    %s248 = sphi 0, %s247
    %s262 = sphi 0, %s248
    %s268 = sphi 0, %s270
    %s271 = sphi 0, %s268
    %s272 = sphi 0, %s271
    %s288 = sphi 0, %s272
  $region4: #{up_block_forward.1} parent=0 // loop_header_branch
    %20 = sbr.rel (%p18) target = $region8
  $region5: #{up_block_forward.1} parent=0 // loop_body
    %s22 = ssub.s32 %s17, 1
    %s23 = ssub.s32 %s17, 2
    %s24 = sadd.s32 %s17, 1
    %s25 = ssub.s32 %s17, %s24
    %p26 = scmp.eq.s32.totalorder %s25, 0
    %s28 = sadd.s32 %s27, 1
    %s29 = scalar_select %p26, %s27, %s28
    %p32 = pneg %p26
    %p33 = scmp.eq.s32.totalorder %s17, 1
    %p34 = por %p32, %p33
    %p35 = scmp.ne.s32.totalorder %s27, %s30
    %p36 = scmp.eq.s32.totalorder %s17, 0
    %p37 = por %p35, %p36
    %p38 = scmp.ne.s32.totalorder %s27, %s30
    %p39 = scmp.eq.s32.totalorder %s22, 1
    %p40 = por %p38, %p39
    %p41 = scmp.ne.s32.totalorder %s30, %s31
    %p42 = scmp.eq.s32.totalorder %s22, 0
    %p43 = por %p41, %p42
    %p44 = scmp.ne.s32.totalorder %s30, %s31
    %p45 = scmp.eq.s32.totalorder %s23, 1
    %p46 = por %p44, %p45
    %p48 = scmp.ne.s32.totalorder %s31, %s47
    %p49 = scmp.eq.s32.totalorder %s23, 0
    %p50 = por %p48, %p49
    %s51 = ssub.s32 %s17, %s24
    %p52 = scmp.eq.s32.totalorder %s51, 0
    %s54 = sadd.s32 %s53, 1
    %s55 = scalar_select %p52, %s53, %s54
    %p58 = pneg %p52
    %p59 = scmp.eq.s32.totalorder %s17, 1
    %p60 = por %p58, %p59
    %p61 = scmp.ne.s32.totalorder %s53, %s56
    %p62 = scmp.eq.s32.totalorder %s17, 0
    %p63 = por %p61, %p62
    %p64 = scmp.ne.s32.totalorder %s53, %s56
    %p65 = scmp.eq.s32.totalorder %s22, 1
    %p66 = por %p64, %p65
    %p67 = scmp.ne.s32.totalorder %s56, %s57
    %p68 = scmp.eq.s32.totalorder %s22, 0
    %p69 = por %p67, %p68
    %p70 = scmp.ne.s32.totalorder %s56, %s57
    %p71 = scmp.eq.s32.totalorder %s23, 1
    %p72 = por %p70, %p71
    %p74 = scmp.ne.s32.totalorder %s57, %s73
    %p75 = scmp.eq.s32.totalorder %s23, 0
    %p76 = por %p74, %p75
    %s78 = sadd.s32 %s77, 1
    %p81 = scmp.eq.s32.totalorder %s17, 1
    %p82 = scmp.ne.s32.totalorder %s77, %s79
    %p83 = scmp.eq.s32.totalorder %s17, 0
    %p84 = por %p82, %p83
    %p85 = scmp.ne.s32.totalorder %s77, %s79
    %p86 = scmp.eq.s32.totalorder %s22, 1
    %p87 = por %p85, %p86
    %p88 = scmp.ne.s32.totalorder %s79, %s80
    %p89 = scmp.eq.s32.totalorder %s22, 0
    %p90 = por %p88, %p89
    %p91 = scmp.ne.s32.totalorder %s79, %s80
    %p92 = scmp.eq.s32.totalorder %s23, 1
    %p93 = por %p91, %p92
    %p95 = scmp.ne.s32.totalorder %s80, %s94
    %p96 = scmp.eq.s32.totalorder %s23, 0
    %p97 = por %p95, %p96
    %s99 = sadd.s32 %s98, 1
    %p102 = scmp.eq.s32.totalorder %s17, 1
    %p103 = scmp.ne.s32.totalorder %s98, %s100
    %p104 = scmp.eq.s32.totalorder %s17, 0
    %p105 = por %p103, %p104
    %p106 = scmp.ne.s32.totalorder %s98, %s100
    %p107 = scmp.eq.s32.totalorder %s22, 1
    %p108 = por %p106, %p107
    %p109 = scmp.ne.s32.totalorder %s100, %s101
    %p110 = scmp.eq.s32.totalorder %s22, 0
    %p111 = por %p109, %p110
    %p112 = scmp.ne.s32.totalorder %s100, %s101
    %p113 = scmp.eq.s32.totalorder %s23, 1
    %p114 = por %p112, %p113
    %p116 = scmp.ne.s32.totalorder %s101, %s115
    %p117 = scmp.eq.s32.totalorder %s23, 0
    %p118 = por %p116, %p117
    %s120 = sadd.s32 %s119, 1
    %p123 = scmp.eq.s32.totalorder %s17, 1
    %p124 = scmp.ne.s32.totalorder %s119, %s121
    %p125 = scmp.eq.s32.totalorder %s17, 0
    %p126 = por %p124, %p125
    %p127 = scmp.ne.s32.totalorder %s119, %s121
    %p128 = scmp.eq.s32.totalorder %s22, 1
    %p129 = por %p127, %p128
    %p130 = scmp.ne.s32.totalorder %s121, %s122
    %p131 = scmp.eq.s32.totalorder %s22, 0
    %p132 = por %p130, %p131
    %p133 = scmp.ne.s32.totalorder %s121, %s122
    %p134 = scmp.eq.s32.totalorder %s23, 1
    %p135 = por %p133, %p134
    %p137 = scmp.ne.s32.totalorder %s122, %s136
    %p138 = scmp.eq.s32.totalorder %s23, 0
    %p139 = por %p137, %p138
    %s141 = sadd.s32 %s140, 1
    %p144 = scmp.eq.s32.totalorder %s17, 1
    %p145 = scmp.ne.s32.totalorder %s140, %s142
    %p146 = scmp.eq.s32.totalorder %s17, 0
    %p147 = por %p145, %p146
    %p148 = scmp.ne.s32.totalorder %s140, %s142
    %p149 = scmp.eq.s32.totalorder %s22, 1
    %p150 = por %p148, %p149
    %p151 = scmp.ne.s32.totalorder %s142, %s143
    %p152 = scmp.eq.s32.totalorder %s22, 0
    %p153 = por %p151, %p152
    %p154 = scmp.ne.s32.totalorder %s142, %s143
    %p155 = scmp.eq.s32.totalorder %s23, 1
    %p156 = por %p154, %p155
    %p158 = scmp.ne.s32.totalorder %s143, %s157
    %p159 = scmp.eq.s32.totalorder %s23, 0
    %p160 = por %p158, %p159
    %s162 = sadd.s32 %s161, 1
    %p165 = scmp.eq.s32.totalorder %s17, 1
    %p166 = scmp.ne.s32.totalorder %s161, %s163
    %p167 = scmp.eq.s32.totalorder %s17, 0
    %p168 = por %p166, %p167
    %p169 = scmp.ne.s32.totalorder %s161, %s163
    %p170 = scmp.eq.s32.totalorder %s22, 1
    %p171 = por %p169, %p170
    %p172 = scmp.ne.s32.totalorder %s163, %s164
    %p173 = scmp.eq.s32.totalorder %s22, 0
    %p174 = por %p172, %p173
    %p175 = scmp.ne.s32.totalorder %s163, %s164
    %p176 = scmp.eq.s32.totalorder %s23, 1
    %p177 = por %p175, %p176
    %p179 = scmp.ne.s32.totalorder %s164, %s178
    %p180 = scmp.eq.s32.totalorder %s23, 0
    %p181 = por %p179, %p180
    %s183 = sadd.s32 %s182, 1
    %p186 = scmp.eq.s32.totalorder %s17, 1
    %p187 = scmp.ne.s32.totalorder %s182, %s184
    %p188 = scmp.eq.s32.totalorder %s17, 0
    %p189 = por %p187, %p188
    %p190 = scmp.ne.s32.totalorder %s182, %s184
    %p191 = scmp.eq.s32.totalorder %s22, 1
    %p192 = por %p190, %p191
    %p193 = scmp.ne.s32.totalorder %s184, %s185
    %p194 = scmp.eq.s32.totalorder %s22, 0
    %p195 = por %p193, %p194
    %p196 = scmp.ne.s32.totalorder %s184, %s185
    %p197 = scmp.eq.s32.totalorder %s23, 1
    %p198 = por %p196, %p197
    %p200 = scmp.ne.s32.totalorder %s185, %s199
    %p201 = scmp.eq.s32.totalorder %s23, 0
    %p202 = por %p200, %p201
    %s204 = sadd.s32 %s203, 1
    %p207 = scmp.eq.s32.totalorder %s17, 1
    %p208 = scmp.ne.s32.totalorder %s203, %s205
    %p209 = scmp.eq.s32.totalorder %s17, 0
    %p210 = por %p208, %p209
    %p211 = scmp.ne.s32.totalorder %s203, %s205
    %p212 = scmp.eq.s32.totalorder %s22, 1
    %p213 = por %p211, %p212
    %p214 = scmp.ne.s32.totalorder %s205, %s206
    %p215 = scmp.eq.s32.totalorder %s22, 0
    %p216 = por %p214, %p215
    %p217 = scmp.ne.s32.totalorder %s205, %s206
    %p218 = scmp.eq.s32.totalorder %s23, 1
    %p219 = por %p217, %p218
    %p221 = scmp.ne.s32.totalorder %s206, %s220
    %p222 = scmp.eq.s32.totalorder %s23, 0
    %p223 = por %p221, %p222
    %s225 = sadd.s32 %s224, 1
    %p228 = scmp.eq.s32.totalorder %s17, 1
    %p229 = scmp.ne.s32.totalorder %s224, %s226
    %p230 = scmp.eq.s32.totalorder %s17, 0
    %p231 = por %p229, %p230
    %p232 = scmp.ne.s32.totalorder %s224, %s226
    %p233 = scmp.eq.s32.totalorder %s22, 1
    %p234 = por %p232, %p233
    %p235 = scmp.ne.s32.totalorder %s226, %s227
    %p236 = scmp.eq.s32.totalorder %s22, 0
    %p237 = por %p235, %p236
    %p238 = scmp.ne.s32.totalorder %s226, %s227
    %p239 = scmp.eq.s32.totalorder %s23, 1
    %p240 = por %p238, %p239
    %p242 = scmp.ne.s32.totalorder %s227, %s241
    %p243 = scmp.eq.s32.totalorder %s23, 0
    %p244 = por %p242, %p243
    %s246 = sadd.s32 %s245, 1
    %p249 = scmp.eq.s32.totalorder %s17, 1
    %p250 = scmp.ne.s32.totalorder %s245, %s247
    %p251 = scmp.eq.s32.totalorder %s17, 0
    %p252 = por %p250, %p251
    %p253 = scmp.ne.s32.totalorder %s245, %s247
    %p254 = scmp.eq.s32.totalorder %s22, 1
    %p255 = por %p253, %p254
    %p256 = scmp.ne.s32.totalorder %s247, %s248
    %p257 = scmp.eq.s32.totalorder %s22, 0
    %p258 = por %p256, %p257
    %p259 = scmp.ne.s32.totalorder %s247, %s248
    %p260 = scmp.eq.s32.totalorder %s23, 1
    %p261 = por %p259, %p260
    %p263 = scmp.ne.s32.totalorder %s248, %s262
    %p264 = scmp.eq.s32.totalorder %s23, 0
    %p265 = por %p263, %p264
    %s266 = ssub.s32 %s17, %s24
    %p267 = scmp.eq.s32.totalorder %s266, 0
    %s269 = sadd.s32 %s268, 1
    %s270 = scalar_select %p267, %s268, %s269
    %p273 = pneg %p267
    %p274 = scmp.eq.s32.totalorder %s17, 1
    %p275 = por %p273, %p274
    %p276 = scmp.ne.s32.totalorder %s268, %s271
    %p277 = scmp.eq.s32.totalorder %s17, 0
    %p278 = por %p276, %p277
    %p279 = scmp.ne.s32.totalorder %s268, %s271
    %p280 = scmp.eq.s32.totalorder %s22, 1
    %p281 = por %p279, %p280
    %p282 = scmp.ne.s32.totalorder %s271, %s272
    %p283 = scmp.eq.s32.totalorder %s22, 0
    %p284 = por %p282, %p283
    %p285 = scmp.ne.s32.totalorder %s271, %s272
    %p286 = scmp.eq.s32.totalorder %s23, 1
    %p287 = por %p285, %p286
    %p289 = scmp.ne.s32.totalorder %s272, %s288
    %p290 = scmp.eq.s32.totalorder %s23, 0
    %p291 = por %p289, %p290
    %p292 = scmp.le.s32.totalorder 1, %s17
    %p293 = scmp.lt.s32.totalorder %s17, 3
    %p294 = pnand %p292, %p293
    %p295 = pneg %p294
    // Predicated region
    $region9: #{up_block_forward.1} parent=5 // pred_check
      _
    $region10: #{up_block_forward.1} parent=5 // pred_check_branch
      %297 = sbr.rel (%p294) target = $region12
    $region11: #{up_block_forward.1} parent=5 // pred_region
      %s298 = ssub.s32 %s17, 1
      // Predicated region
      $region13: #{up_block_forward.1} parent=11 // pred_check
        %p299 = pneg %p90
      $region14: #{up_block_forward.1} parent=11 // pred_check_branch
        %301 = sbr.rel (%p299) target = $region16
      $region15: #{up_block_forward.1} parent=11 // pred_region
        _
      $region16: #{up_block_forward.1} parent=11 // pred_fallthru
        _
      // Predicated region
      $region17: #{up_block_forward.1} parent=11 // pred_check
        %p302 = pneg %p111
      $region18: #{up_block_forward.1} parent=11 // pred_check_branch
        %304 = sbr.rel (%p302) target = $region20
      $region19: #{up_block_forward.1} parent=11 // pred_region
        _
      $region20: #{up_block_forward.1} parent=11 // pred_fallthru
        _
      // Predicated region
      $region21: #{up_block_forward.1} parent=11 // pred_check
        %p305 = pneg %p132
      $region22: #{up_block_forward.1} parent=11 // pred_check_branch
        %307 = sbr.rel (%p305) target = $region24
      $region23: #{up_block_forward.1} parent=11 // pred_region
        _
      $region24: #{up_block_forward.1} parent=11 // pred_fallthru
        _
      // Predicated region
      $region25: #{up_block_forward.1} parent=11 // pred_check
        %p308 = pneg %p153
      $region26: #{up_block_forward.1} parent=11 // pred_check_branch
        %310 = sbr.rel (%p308) target = $region28
      $region27: #{up_block_forward.1} parent=11 // pred_region
        _
      $region28: #{up_block_forward.1} parent=11 // pred_fallthru
        _
      // Predicated region
      $region29: #{up_block_forward.1} parent=11 // pred_check
        %p311 = pneg %p174
      $region30: #{up_block_forward.1} parent=11 // pred_check_branch
        %313 = sbr.rel (%p311) target = $region32
      $region31: #{up_block_forward.1} parent=11 // pred_region
        _
      $region32: #{up_block_forward.1} parent=11 // pred_fallthru
        _
      // Predicated region
      $region33: #{up_block_forward.1} parent=11 // pred_check
        %p314 = pneg %p195
      $region34: #{up_block_forward.1} parent=11 // pred_check_branch
        %316 = sbr.rel (%p314) target = $region36
      $region35: #{up_block_forward.1} parent=11 // pred_region
        _
      $region36: #{up_block_forward.1} parent=11 // pred_fallthru
        _
      // Predicated region
      $region37: #{up_block_forward.1} parent=11 // pred_check
        %p317 = pneg %p216
      $region38: #{up_block_forward.1} parent=11 // pred_check_branch
        %319 = sbr.rel (%p317) target = $region40
      $region39: #{up_block_forward.1} parent=11 // pred_region
        _
      $region40: #{up_block_forward.1} parent=11 // pred_fallthru
        _
      // Predicated region
      $region41: #{up_block_forward.1} parent=11 // pred_check
        %p320 = pneg %p237
      $region42: #{up_block_forward.1} parent=11 // pred_check_branch
        %322 = sbr.rel (%p320) target = $region44
      $region43: #{up_block_forward.1} parent=11 // pred_region
        _
      $region44: #{up_block_forward.1} parent=11 // pred_fallthru
        _
      // Predicated region
      $region45: #{up_block_forward.1} parent=11 // pred_check
        %p323 = pneg %p258
      $region46: #{up_block_forward.1} parent=11 // pred_check_branch
        %325 = sbr.rel (%p323) target = $region48
      $region47: #{up_block_forward.1} parent=11 // pred_region
        _
      $region48: #{up_block_forward.1} parent=11 // pred_fallthru
        _
    $region12: #{up_block_forward.1} parent=5 // pred_fallthru
      _
    %p326 = scmp.lt.s32.totalorder %s17, 2
    // Predicated region
    $region49: #{up_block_forward.1} parent=5 // pred_check
      %p327 = pneg %p326
    $region50: #{up_block_forward.1} parent=5 // pred_check_branch
      %329 = sbr.rel (%p327) target = $region52
    $region51: #{up_block_forward.1} parent=5 // pred_region
      // Predicated region
      $region53: #{up_block_forward.1} parent=51 // pred_check
        %p330 = pneg %p37
      $region54: #{up_block_forward.1} parent=51 // pred_check_branch
        %332 = sbr.rel (%p330) target = $region56
      $region55: #{up_block_forward.1} parent=51 // pred_region
        %p333 = scmp.lt.s32.totalorder %s17, 1
        %s334 = scalar_select %p333, %s17, 1
        %s335 = smul.addr %s334, 8
        %s336 = scalar_lea.vmem %s0, %s335
      $region56: #{up_block_forward.1} parent=51 // pred_fallthru
        _
      // Predicated region
      $region57: #{up_block_forward.1} parent=51 // pred_check
        %p337 = pneg %p63
      $region58: #{up_block_forward.1} parent=51 // pred_check_branch
        %339 = sbr.rel (%p337) target = $region60
      $region59: #{up_block_forward.1} parent=51 // pred_region
        %p340 = scmp.lt.s32.totalorder %s17, 1
        %s341 = scalar_select %p340, %s17, 1
        %s342 = smul.addr %s341, 2
        %s343 = smul.addr %s342, 8
        %s344 = scalar_lea.vmem %s1, %s343
      $region60: #{up_block_forward.1} parent=51 // pred_fallthru
        _
    $region52: #{up_block_forward.1} parent=5 // pred_fallthru
      _
    %p345 = scmp.le.s32.totalorder 1, %s17
    %p346 = scmp.lt.s32.totalorder %s17, 3
    %p347 = pnand %p345, %p346
    %p348 = pneg %p347
    // Predicated region
    $region61: #{up_block_forward.1} parent=5 // pred_check
      _
    $region62: #{up_block_forward.1} parent=5 // pred_check_branch
      %350 = sbr.rel (%p347) target = $region64
    $region63: #{up_block_forward.1} parent=5 // pred_region
      %s351 = ssub.s32 %s17, 1
      %p352 = scmp.lt.s32.totalorder %s22, 1
      %s353 = scalar_select %p352, %s22, 1
      %s354 = smul.addr %s353, 8
      %s355 = scalar_lea.vmem %s0, %s354
      %p356 = pneg %p43
      %p357 = pneg %p40
      %p358 = scmp.lt.s32.totalorder %s22, 1
      %s359 = scalar_select %p358, %s22, 1
      %s360 = smul.addr %s359, 2
      %s361 = smul.addr %s360, 8
      %s362 = scalar_lea.vmem %s1, %s361
      %p363 = pneg %p69
      %p364 = pneg %p66
      %p365 = pneg %p90
      %p366 = pneg %p87
      %p367 = pneg %p111
      %p368 = pneg %p108
      %p369 = pneg %p132
      %p370 = pneg %p129
      %p371 = pneg %p153
      %p372 = pneg %p150
      %p373 = pneg %p174
      %p374 = pneg %p171
      %p375 = pneg %p195
      %p376 = pneg %p192
      %p377 = pneg %p216
      %p378 = pneg %p213
      %p379 = pneg %p237
      %p380 = pneg %p234
      %p381 = pneg %p258
      %p382 = pneg %p255
      %p383 = pneg %p284
      %p384 = pneg %p281
      %p385 = scmp.lt.s32.totalorder %s22, 1
      %s386 = scalar_select %p385, %s22, 1
      %s387 = smul.addr %s386, 2
      %s388 = smul.addr %s387, 8
      %s389 = scalar_lea.vmem %s11, %s388
      %p390 = scmp.lt.s32.totalorder %s22, 1
      %s391 = scalar_select %p390, %s22, 1
      %s392 = smul.addr %s391, 8
      %s393 = scalar_lea.vmem %s0, %s392
      %p394 = scmp.lt.s32.totalorder %s22, 1
      %s395 = scalar_select %p394, %s22, 1
      %s396 = smul.addr %s395, 2
      %s397 = smul.addr %s396, 8
      %s398 = scalar_lea.vmem %s1, %s397
      %p399 = scmp.lt.s32.totalorder %s22, 1
      %s400 = scalar_select %p399, %s22, 1
      %s401 = smul.addr %s400, 2
      %s402 = smul.addr %s401, 8
      %s403 = scalar_lea.vmem %s11, %s402
      %v405 = vld [vmem:[%s393] sm:$0xff]
      %v406 = vld [vmem:[%s2] sm:$0xff]
      %v407 = vld [vmem:[%s2 + $0x8] sm:$0xff]
      %v408 = vld [vmem:[%s2 + $0x10] sm:$0xff]
      %v409 = vld [vmem:[%s2 + $0x18] sm:$0xff]
      %v410 = vld [vmem:[%s2 + $0x20] sm:$0xff]
      %v411 = vld [vmem:[%s2 + $0x28] sm:$0xff]
      %v412 = vld [vmem:[%s2 + $0x30] sm:$0xff]
      %v413 = vld [vmem:[%s2 + $0x38] sm:$0xff]
      %v414 = vld [vmem:[%s3] sm:$0x1]
      %v416 = vperm.slane %v414, 0
      %vm418 = vcmask 523264
      %v420 = vsel %vm418, %v405, 0
      %422 = vmatpush.msra.mxu0 0.0
      %423 = vmatpush.msra.mxu0 0.0
      %424 = vmatpush.msra.mxu0 0.0
      %425 = vmatpush.msra.mxu0 0.0
      %426 = vmatpush.msra.mxu0 0.0
      %427 = vmatpush.msra.mxu0 0.0
      %428 = vmatpush.msra.mxu0 0.0
      %429 = vmatpush.msra.mxu0 0.0
      %430 = vmatpush.msra.mxu0 %v413
      %431 = vmatpush.msra.mxu0 %v412
      %432 = vmatpush.msra.mxu0 %v411
      %433 = vmatpush.msra.mxu0 %v410
      %434 = vmatpush.msra.mxu0 %v409
      %435 = vmatpush.msra.mxu0 %v408
      %436 = vmatpush.msra.mxu0 %v407
      %437 = vmatpush.msra.mxu0 %v406
      %438 = vmatmul.f32.gmra.mxu0 %v420
      %v439 = vpop.f32.mrf.mxu0
      %v440 = vadd.f32 %v416, %v439
      %441 = vdwg.mxu0
      %v442 = vld [vmem:[%s4] sm:$0xff]
      %v443 = vld [vmem:[%s4 + $0x8] sm:$0xff]
      %vm444 = vcmask 64512
      %v446 = vsel %vm444, %v442, 0
      %v449 = vsel %vm444, %v443, 0
      %451 = vmatpush.msra.mxu0 0.0
      %452 = vmatpush.msra.mxu0 0.0
      %453 = vmatpush.msra.mxu0 0.0
      %454 = vmatpush.msra.mxu0 0.0
      %455 = vmatpush.msra.mxu0 0.0
      %456 = vmatpush.msra.mxu0 0.0
      %457 = vmatpush.msra.mxu0 0.0
      %458 = vmatpush.msra.mxu0 0.0
      %459 = vmatpush.msra.mxu0 0.0
      %460 = vmatpush.msra.mxu0 0.0
      %461 = vmatpush.msra.mxu0 0.0
      %462 = vmatpush.msra.mxu0 0.0
      %463 = vmatpush.msra.mxu0 0.0
      %464 = vmatpush.msra.mxu0 0.0
      %465 = vmatpush.msra.mxu0 0.0
      %466 = vmatpush.msra.mxu0 %v440
      %467 = vmatmul.f32.gmra.mxu0 %v446
      %v468 = vpop.f32.mrf.mxu0
      %v469 = vadd.f32 0.0, %v468
      %470 = vmatmul.f32.gmra.mxu0 %v449
      %v471 = vpop.f32.mrf.mxu0
      %v472 = vadd.f32 0.0, %v471
      %473 = vdwg.mxu0
      %v474 = vld [vmem:[%s5] sm:$0xff]
      %v475 = vld [vmem:[%s5 + $0x8] sm:$0xff]
      %v476 = vld [vmem:[%s5 + $0x10] sm:$0xff]
      %v477 = vld [vmem:[%s5 + $0x18] sm:$0xff]
      %vm478 = vcmask 261120
      %v480 = vsel %vm478, %v469, 0
      %v483 = vsel %vm478, %v472, 0
      %485 = vmatpush.msra.mxu0 0.0
      %486 = vmatpush.msra.mxu0 0.0
      %487 = vmatpush.msra.mxu0 0.0
      %488 = vmatpush.msra.mxu0 0.0
      %489 = vmatpush.msra.mxu0 0.0
      %490 = vmatpush.msra.mxu0 0.0
      %491 = vmatpush.msra.mxu0 0.0
      %492 = vmatpush.msra.mxu0 0.0
      %493 = vmatpush.msra.mxu0 0.0
      %494 = vmatpush.msra.mxu0 0.0
      %495 = vmatpush.msra.mxu0 0.0
      %496 = vmatpush.msra.mxu0 0.0
      %497 = vmatpush.msra.mxu0 %v477
      %498 = vmatpush.msra.mxu0 %v476
      %499 = vmatpush.msra.mxu0 %v475
      %500 = vmatpush.msra.mxu0 %v474
      %501 = vmatmul.f32.gmra.mxu0 %v480
      %v502 = vpop.f32.mrf.mxu0
      %v503 = vadd.f32 0.0, %v502
      %504 = vmatmul.f32.gmra.mxu0 %v483
      %v505 = vpop.f32.mrf.mxu0
      %v506 = vadd.f32 0.0, %v505
      %507 = vdwg.mxu0
      %v508 = vld [vmem:[%s398] sm:$0xff]
      %v509 = vld [vmem:[%s398 + $0x8] sm:$0x3f]
      %v510 = vpack.c.bf16 %v509, %v508
      %v511 = vld [vmem:[%s6] sm:$0xf]
      %v512 = vld [vmem:[%s6 + $0x4] sm:$0xf]
      %v513 = vld [vmem:[%s6 + $0x8] sm:$0xf]
      %v514 = vld [vmem:[%s6 + $0xc] sm:$0xf]
      %v515 = vld [vmem:[%s6 + $0x10] sm:$0xf]
      %v516 = vld [vmem:[%s6 + $0x14] sm:$0xf]
      %v517 = vld [vmem:[%s6 + $0x18] sm:$0xf]
      %v518 = vld [vmem:[%s6 + $0x1c] sm:$0xf]
      %v519 = vpack.c.bf16 %v506, %v503
      %v520 = vld [vmem:[%s7] sm:$0xf]
      %v521 = vld [vmem:[%s7 + $0x4] sm:$0xf]
      %v522 = vld [vmem:[%s7 + $0x8] sm:$0xf]
      %v523 = vld [vmem:[%s7 + $0xc] sm:$0xf]
      %v524 = vld [vmem:[%s7 + $0x10] sm:$0xf]
      %v525 = vld [vmem:[%s7 + $0x14] sm:$0xf]
      %v526 = vld [vmem:[%s7 + $0x18] sm:$0xf]
      %v527 = vld [vmem:[%s7 + $0x1c] sm:$0xf]
      %v536 = vunpack.c.l.b16 %v520
      %v537 = vunpack.c.l.b16 %v521
      %v538 = vunpack.c.l.b16 %v522
      %v539 = vunpack.c.l.b16 %v523
      %v540 = vunpack.c.l.b16 %v524
      %v541 = vunpack.c.l.b16 %v525
      %v542 = vunpack.c.l.b16 %v526
      %v543 = vunpack.c.l.b16 %v527
      %v544 = vpack.c.b16 %v537, %v536
      %v545 = vpack.c.b16 %v539, %v538
      %v546 = vpack.c.b16 %v541, %v540
      %v547 = vpack.c.b16 %v543, %v542
      %v553 = vsel %vm418, %v519, 0
      %555 = vmatpush.bf16.msra.mxu0 0
      %556 = vmatpush.bf16.msra.mxu0 0
      %557 = vmatpush.bf16.msra.mxu0 0
      %558 = vmatpush.bf16.msra.mxu0 0
      %559 = vmatpush.bf16.msra.mxu0 %v547
      %560 = vmatpush.bf16.msra.mxu0 %v546
      %561 = vmatpush.bf16.msra.mxu0 %v545
      %562 = vmatpush.bf16.msra.mxu0 %v544
      %563 = vmatmul.bf16.gmra.mxu0 %v553
      %v564 = vpop.f32.mrf.mxu0
      %v565 = vadd.f32 0.0, %v564
      %v566 = vpop.f32.mrf.mxu0
      %v567 = vadd.f32 0.0, %v566
      %568 = vdwg.mxu0
      %v577 = vunpack.c.l.b16 %v511
      %v578 = vunpack.c.l.b16 %v512
      %v579 = vunpack.c.l.b16 %v513
      %v580 = vunpack.c.l.b16 %v514
      %v581 = vunpack.c.l.b16 %v515
      %v582 = vunpack.c.l.b16 %v516
      %v583 = vunpack.c.l.b16 %v517
      %v584 = vunpack.c.l.b16 %v518
      %v585 = vpack.c.b16 %v578, %v577
      %v586 = vpack.c.b16 %v580, %v579
      %v587 = vpack.c.b16 %v582, %v581
      %v588 = vpack.c.b16 %v584, %v583
      %v594 = vsel %vm418, %v510, 0
      %596 = vmatpush.bf16.msra.mxu0 0
      %597 = vmatpush.bf16.msra.mxu0 0
      %598 = vmatpush.bf16.msra.mxu0 0
      %599 = vmatpush.bf16.msra.mxu0 0
      %600 = vmatpush.bf16.msra.mxu0 %v588
      %601 = vmatpush.bf16.msra.mxu0 %v587
      %602 = vmatpush.bf16.msra.mxu0 %v586
      %603 = vmatpush.bf16.msra.mxu0 %v585
      %604 = vmatmul.bf16.gmra.mxu0 %v594
      %v605 = vpop.f32.mrf.mxu0
      %v606 = vadd.f32 %v565, %v605
      %v607 = vpop.f32.mrf.mxu0
      %v608 = vadd.f32 %v567, %v607
      %609 = vdwg.mxu0
      %v610 = vld [vmem:[%s398 + $0x1] sm:$0xff]
      %v611 = vld [vmem:[%s398 + $0x9] sm:$0x3f]
      %v612 = vpack.c.bf16 %v611, %v610
      %s613 = scalar_lea.vmem %s6, 32
      %v614 = vld [vmem:[%s613] sm:$0xf]
      %v615 = vld [vmem:[%s613 + $0x4] sm:$0xf]
      %v616 = vld [vmem:[%s613 + $0x8] sm:$0xf]
      %v617 = vld [vmem:[%s613 + $0xc] sm:$0xf]
      %v618 = vld [vmem:[%s613 + $0x10] sm:$0xf]
      %v619 = vld [vmem:[%s613 + $0x14] sm:$0xf]
      %v620 = vld [vmem:[%s613 + $0x18] sm:$0xf]
      %v621 = vld [vmem:[%s613 + $0x1c] sm:$0xf]
      %v630 = vunpack.c.l.b16 %v614
      %v631 = vunpack.c.l.b16 %v615
      %v632 = vunpack.c.l.b16 %v616
      %v633 = vunpack.c.l.b16 %v617
      %v634 = vunpack.c.l.b16 %v618
      %v635 = vunpack.c.l.b16 %v619
      %v636 = vunpack.c.l.b16 %v620
      %v637 = vunpack.c.l.b16 %v621
      %v638 = vpack.c.b16 %v631, %v630
      %v639 = vpack.c.b16 %v633, %v632
      %v640 = vpack.c.b16 %v635, %v634
      %v641 = vpack.c.b16 %v637, %v636
      %v647 = vsel %vm418, %v612, 0
      %649 = vmatpush.bf16.msra.mxu0 0
      %650 = vmatpush.bf16.msra.mxu0 0
      %651 = vmatpush.bf16.msra.mxu0 0
      %652 = vmatpush.bf16.msra.mxu0 0
      %653 = vmatpush.bf16.msra.mxu0 %v641
      %654 = vmatpush.bf16.msra.mxu0 %v640
      %655 = vmatpush.bf16.msra.mxu0 %v639
      %656 = vmatpush.bf16.msra.mxu0 %v638
      %657 = vmatmul.bf16.gmra.mxu0 %v647
      %v658 = vpop.f32.mrf.mxu0
      %v659 = vadd.f32 0.0, %v658
      %v660 = vpop.f32.mrf.mxu0
      %v661 = vadd.f32 0.0, %v660
      %662 = vdwg.mxu0
      %v663 = vadd.f32 %v606, %v659
      %v664 = vadd.f32 %v608, %v661
      %s665 = scalar_lea.vmem %s7, 32
      %v666 = vld [vmem:[%s665] sm:$0xf]
      %v667 = vld [vmem:[%s665 + $0x4] sm:$0xf]
      %v668 = vld [vmem:[%s665 + $0x8] sm:$0xf]
      %v669 = vld [vmem:[%s665 + $0xc] sm:$0xf]
      %v670 = vld [vmem:[%s665 + $0x10] sm:$0xf]
      %v671 = vld [vmem:[%s665 + $0x14] sm:$0xf]
      %v672 = vld [vmem:[%s665 + $0x18] sm:$0xf]
      %v673 = vld [vmem:[%s665 + $0x1c] sm:$0xf]
      %v674 = vshrl.u32 %v519, 16
      %v676 = vshll.u32 %v519, 16
      %v678 = vrot.slane %v676, 1
      %v679 = vor.u32 %v674, %v678
      %v688 = vunpack.c.l.b16 %v666
      %v689 = vunpack.c.l.b16 %v667
      %v690 = vunpack.c.l.b16 %v668
      %v691 = vunpack.c.l.b16 %v669
      %v692 = vunpack.c.l.b16 %v670
      %v693 = vunpack.c.l.b16 %v671
      %v694 = vunpack.c.l.b16 %v672
      %v695 = vunpack.c.l.b16 %v673
      %v696 = vpack.c.b16 %v689, %v688
      %v697 = vpack.c.b16 %v691, %v690
      %v698 = vpack.c.b16 %v693, %v692
      %v699 = vpack.c.b16 %v695, %v694
      %v705 = vsel %vm418, %v679, 0
      %707 = vmatpush.bf16.msra.mxu0 0
      %708 = vmatpush.bf16.msra.mxu0 0
      %709 = vmatpush.bf16.msra.mxu0 0
      %710 = vmatpush.bf16.msra.mxu0 0
      %711 = vmatpush.bf16.msra.mxu0 %v699
      %712 = vmatpush.bf16.msra.mxu0 %v698
      %713 = vmatpush.bf16.msra.mxu0 %v697
      %714 = vmatpush.bf16.msra.mxu0 %v696
      %715 = vmatmul.bf16.gmra.mxu0 %v705
      %v716 = vpop.f32.mrf.mxu0
      %v717 = vadd.f32 0.0, %v716
      %v718 = vpop.f32.mrf.mxu0
      %v719 = vadd.f32 0.0, %v718
      %720 = vdwg.mxu0
      %v721 = vadd.f32 %v663, %v717
      %v722 = vadd.f32 %v664, %v719
      %v723 = vld [vmem:[%s398 + $0x2] sm:$0xff]
      %v724 = vld [vmem:[%s398 + $0xa] sm:$0x3f]
      %v725 = vpack.c.bf16 %v724, %v723
      %s726 = scalar_lea.vmem %s6, 64
      %v727 = vld [vmem:[%s726] sm:$0xf]
      %v728 = vld [vmem:[%s726 + $0x4] sm:$0xf]
      %v729 = vld [vmem:[%s726 + $0x8] sm:$0xf]
      %v730 = vld [vmem:[%s726 + $0xc] sm:$0xf]
      %v731 = vld [vmem:[%s726 + $0x10] sm:$0xf]
      %v732 = vld [vmem:[%s726 + $0x14] sm:$0xf]
      %v733 = vld [vmem:[%s726 + $0x18] sm:$0xf]
      %v734 = vld [vmem:[%s726 + $0x1c] sm:$0xf]
      %v743 = vunpack.c.l.b16 %v727
      %v744 = vunpack.c.l.b16 %v728
      %v745 = vunpack.c.l.b16 %v729
      %v746 = vunpack.c.l.b16 %v730
      %v747 = vunpack.c.l.b16 %v731
      %v748 = vunpack.c.l.b16 %v732
      %v749 = vunpack.c.l.b16 %v733
      %v750 = vunpack.c.l.b16 %v734
      %v751 = vpack.c.b16 %v744, %v743
      %v752 = vpack.c.b16 %v746, %v745
      %v753 = vpack.c.b16 %v748, %v747
      %v754 = vpack.c.b16 %v750, %v749
      %v760 = vsel %vm418, %v725, 0
      %762 = vmatpush.bf16.msra.mxu0 0
      %763 = vmatpush.bf16.msra.mxu0 0
      %764 = vmatpush.bf16.msra.mxu0 0
      %765 = vmatpush.bf16.msra.mxu0 0
      %766 = vmatpush.bf16.msra.mxu0 %v754
      %767 = vmatpush.bf16.msra.mxu0 %v753
      %768 = vmatpush.bf16.msra.mxu0 %v752
      %769 = vmatpush.bf16.msra.mxu0 %v751
      %770 = vmatmul.bf16.gmra.mxu0 %v760
      %v771 = vpop.f32.mrf.mxu0
      %v772 = vadd.f32 0.0, %v771
      %v773 = vpop.f32.mrf.mxu0
      %v774 = vadd.f32 0.0, %v773
      %775 = vdwg.mxu0
      %v776 = vadd.f32 %v721, %v772
      %v777 = vadd.f32 %v722, %v774
      %s778 = scalar_lea.vmem %s7, 64
      %v779 = vld [vmem:[%s778] sm:$0xf]
      %v780 = vld [vmem:[%s778 + $0x4] sm:$0xf]
      %v781 = vld [vmem:[%s778 + $0x8] sm:$0xf]
      %v782 = vld [vmem:[%s778 + $0xc] sm:$0xf]
      %v783 = vld [vmem:[%s778 + $0x10] sm:$0xf]
      %v784 = vld [vmem:[%s778 + $0x14] sm:$0xf]
      %v785 = vld [vmem:[%s778 + $0x18] sm:$0xf]
      %v786 = vld [vmem:[%s778 + $0x1c] sm:$0xf]
      %v788 = vrot.slane %v519, 1
      %v797 = vunpack.c.l.b16 %v779
      %v798 = vunpack.c.l.b16 %v780
      %v799 = vunpack.c.l.b16 %v781
      %v800 = vunpack.c.l.b16 %v782
      %v801 = vunpack.c.l.b16 %v783
      %v802 = vunpack.c.l.b16 %v784
      %v803 = vunpack.c.l.b16 %v785
      %v804 = vunpack.c.l.b16 %v786
      %v805 = vpack.c.b16 %v798, %v797
      %v806 = vpack.c.b16 %v800, %v799
      %v807 = vpack.c.b16 %v802, %v801
      %v808 = vpack.c.b16 %v804, %v803
      %v814 = vsel %vm418, %v788, 0
      %816 = vmatpush.bf16.msra.mxu0 0
      %817 = vmatpush.bf16.msra.mxu0 0
      %818 = vmatpush.bf16.msra.mxu0 0
      %819 = vmatpush.bf16.msra.mxu0 0
      %820 = vmatpush.bf16.msra.mxu0 %v808
      %821 = vmatpush.bf16.msra.mxu0 %v807
      %822 = vmatpush.bf16.msra.mxu0 %v806
      %823 = vmatpush.bf16.msra.mxu0 %v805
      %824 = vmatmul.bf16.gmra.mxu0 %v814
      %v825 = vpop.f32.mrf.mxu0
      %v826 = vadd.f32 0.0, %v825
      %v827 = vpop.f32.mrf.mxu0
      %v828 = vadd.f32 0.0, %v827
      %829 = vdwg.mxu0
      %v830 = vadd.f32 %v776, %v826
      %v831 = vadd.f32 %v777, %v828
      %v832 = vld [vmem:[%s8] sm:$0x1]
      %v834 = vperm.slane %v832, 0
      %v836 = vadd.f32 %v830, %v834
      %v837 = vadd.f32 %v831, %v834
      %v838 = vmax.f32 %v836, 0.0
      %v839 = vmax.f32 %v837, 0.0
      %v840 = vpack.c.bf16 %v839, %v838
      %v841 = vld [vmem:[%s9] sm:$0xf]
      %v842 = vld [vmem:[%s9 + $0x4] sm:$0xf]
      %v843 = vld [vmem:[%s9 + $0x8] sm:$0xf]
      %v844 = vld [vmem:[%s9 + $0xc] sm:$0xf]
      %v845 = vld [vmem:[%s9 + $0x10] sm:$0xf]
      %v846 = vld [vmem:[%s9 + $0x14] sm:$0xf]
      %v847 = vld [vmem:[%s9 + $0x18] sm:$0xf]
      %s848 = scalar_lea.vmem %s9, 28
      %v849 = vld [vmem:[%s848] sm:$0xf]
      %v850 = vld [vmem:[%s848 + $0x4] sm:$0xf]
      %v851 = vld [vmem:[%s848 + $0x8] sm:$0xf]
      %v852 = vld [vmem:[%s848 + $0xc] sm:$0xf]
      %v853 = vld [vmem:[%s848 + $0x10] sm:$0xf]
      %v854 = vld [vmem:[%s848 + $0x14] sm:$0xf]
      %v855 = vld [vmem:[%s848 + $0x18] sm:$0xf]
      %v857 = vshrl.u32 %v840, 16
      %v859 = vshll.u32 %v840, 16
      %v861 = vrot.slane %v859, 1
      %v862 = vor.u32 %v857, %v861
      %v870 = vunpack.c.l.b16 %v849
      %v871 = vunpack.c.l.b16 %v850
      %v872 = vunpack.c.l.b16 %v851
      %v873 = vunpack.c.l.b16 %v852
      %v874 = vunpack.c.l.b16 %v853
      %v875 = vunpack.c.l.b16 %v854
      %v876 = vunpack.c.l.b16 %v855
      %v877 = vpack.c.b16 %v871, %v870
      %v878 = vpack.c.b16 %v873, %v872
      %v879 = vpack.c.b16 %v875, %v874
      %v880 = vpack.c.b16 %v876, %v876
      %vm884 = vcmask 457728
      %v886 = vsel %vm884, %v862, 0
      %vm888 = vcmask 1043456
      %v890 = vsel %vm888, %v880, 0
      %892 = vmatpush.bf16.msra.mxu0 0
      %893 = vmatpush.bf16.msra.mxu0 0
      %894 = vmatpush.bf16.msra.mxu0 0
      %895 = vmatpush.bf16.msra.mxu0 0
      %896 = vmatpush.bf16.msra.mxu0 %v890
      %897 = vmatpush.bf16.msra.mxu0 %v879
      %898 = vmatpush.bf16.msra.mxu0 %v878
      %899 = vmatpush.bf16.msra.mxu0 %v877
      %900 = vmatmul.bf16.gmra.mxu0 %v886
      %v901 = vpop.f32.mrf.mxu0
      %v902 = vadd.f32 0.0, %v901
      %v903 = vpop.f32.mrf.mxu0
      %v904 = vadd.f32 0.0, %v903
      %905 = vdwg.mxu0
      %v913 = vunpack.c.l.b16 %v841
      %v914 = vunpack.c.l.b16 %v842
      %v915 = vunpack.c.l.b16 %v843
      %v916 = vunpack.c.l.b16 %v844
      %v917 = vunpack.c.l.b16 %v845
      %v918 = vunpack.c.l.b16 %v846
      %v919 = vunpack.c.l.b16 %v847
      %v920 = vpack.c.b16 %v914, %v913
      %v921 = vpack.c.b16 %v916, %v915
      %v922 = vpack.c.b16 %v918, %v917
      %v923 = vpack.c.b16 %v919, %v919
      %v927 = vsel %vm884, %v840, 0
      %v930 = vsel %vm888, %v923, 0
      %932 = vmatpush.bf16.msra.mxu0 0
      %933 = vmatpush.bf16.msra.mxu0 0
      %934 = vmatpush.bf16.msra.mxu0 0
      %935 = vmatpush.bf16.msra.mxu0 0
      %936 = vmatpush.bf16.msra.mxu0 %v930
      %937 = vmatpush.bf16.msra.mxu0 %v922
      %938 = vmatpush.bf16.msra.mxu0 %v921
      %939 = vmatpush.bf16.msra.mxu0 %v920
      %940 = vmatmul.bf16.gmra.mxu0 %v927
      %v941 = vpop.f32.mrf.mxu0
      %v942 = vadd.f32 %v902, %v941
      %v943 = vpop.f32.mrf.mxu0
      %v944 = vadd.f32 %v904, %v943
      %945 = vdwg.mxu0
      %s946 = scalar_lea.vmem %s9, 56
      %v947 = vld [vmem:[%s946] sm:$0xf]
      %v948 = vld [vmem:[%s946 + $0x4] sm:$0xf]
      %v949 = vld [vmem:[%s946 + $0x8] sm:$0xf]
      %v950 = vld [vmem:[%s946 + $0xc] sm:$0xf]
      %v951 = vld [vmem:[%s946 + $0x10] sm:$0xf]
      %v952 = vld [vmem:[%s946 + $0x14] sm:$0xf]
      %v953 = vld [vmem:[%s946 + $0x18] sm:$0xf]
      %v955 = vrot.slane %v840, 1
      %v963 = vunpack.c.l.b16 %v947
      %v964 = vunpack.c.l.b16 %v948
      %v965 = vunpack.c.l.b16 %v949
      %v966 = vunpack.c.l.b16 %v950
      %v967 = vunpack.c.l.b16 %v951
      %v968 = vunpack.c.l.b16 %v952
      %v969 = vunpack.c.l.b16 %v953
      %v970 = vpack.c.b16 %v964, %v963
      %v971 = vpack.c.b16 %v966, %v965
      %v972 = vpack.c.b16 %v968, %v967
      %v973 = vpack.c.b16 %v969, %v969
      %v978 = vsel %vm884, %v955, 0
      %v981 = vsel %vm888, %v973, 0
      %983 = vmatpush.bf16.msra.mxu0 0
      %984 = vmatpush.bf16.msra.mxu0 0
      %985 = vmatpush.bf16.msra.mxu0 0
      %986 = vmatpush.bf16.msra.mxu0 0
      %987 = vmatpush.bf16.msra.mxu0 %v981
      %988 = vmatpush.bf16.msra.mxu0 %v972
      %989 = vmatpush.bf16.msra.mxu0 %v971
      %990 = vmatpush.bf16.msra.mxu0 %v970
      %991 = vmatmul.bf16.gmra.mxu0 %v978
      %v992 = vpop.f32.mrf.mxu0
      %v993 = vadd.f32 0.0, %v992
      %v994 = vpop.f32.mrf.mxu0
      %v995 = vadd.f32 0.0, %v994
      %996 = vdwg.mxu0
      %v997 = vadd.f32 %v942, %v993
      %v998 = vadd.f32 %v944, %v995
      %v999 = vld [vmem:[%s10] sm:$0x1]
      %v1001 = vperm.slane %v999, 0
      %v1003 = vadd.f32 %v997, %v1001
      %v1004 = vadd.f32 %v998, %v1001
      %v1005 = vmax.f32 %v1003, 0.0
      %v1006 = vmax.f32 %v1004, 0.0
      %vm1007 = vcmask 392192
      %1008 = vst.msk [vmem:[%s403] sm:$0xff] %vm1007, %v1005
      %vm1009 = vcmask 388096
      %1010 = vst.msk [vmem:[%s403 + $0x8] sm:$0xf] %vm1009, %v1006
      %p1011 = scmp.lt.s32.totalorder %s22, 1
      %s1012 = scalar_select %p1011, %s22, 1
      %s1013 = smul.addr %s1012, 2
      %s1014 = smul.addr %s1013, 8
      %s1015 = scalar_lea.vmem %s11, %s1014
      // Predicated region
      $region65: #{up_block_forward.1} parent=63 // pred_check
        %p1016 = pneg %p281
      $region66: #{up_block_forward.1} parent=63 // pred_check_branch
        %1018 = sbr.rel (%p1016) target = $region68
      $region67: #{up_block_forward.1} parent=63 // pred_region
        _
      $region68: #{up_block_forward.1} parent=63 // pred_fallthru
        _
    $region64: #{up_block_forward.1} parent=5 // pred_fallthru
      _
    %p1019 = scmp.le.s32.totalorder 2, %s17
    // Predicated region
    $region69: #{up_block_forward.1} parent=5 // pred_check
      %p1020 = pneg %p1019
    $region70: #{up_block_forward.1} parent=5 // pred_check_branch
      %1022 = sbr.rel (%p1020) target = $region72
    $region71: #{up_block_forward.1} parent=5 // pred_region
      %s1023 = ssub.s32 %s17, 2
      // Predicated region
      $region73: #{up_block_forward.1} parent=71 // pred_check
        %p1024 = pneg %p287
      $region74: #{up_block_forward.1} parent=71 // pred_check_branch
        %1026 = sbr.rel (%p1024) target = $region76
      $region75: #{up_block_forward.1} parent=71 // pred_region
        %p1027 = scmp.lt.s32.totalorder %s23, 1
        %s1028 = scalar_select %p1027, %s23, 1
        %s1029 = smul.addr %s1028, 2
        %s1030 = smul.addr %s1029, 8
        %s1031 = scalar_lea.vmem %s11, %s1030
      $region76: #{up_block_forward.1} parent=71 // pred_fallthru
        _
    $region72: #{up_block_forward.1} parent=5 // pred_fallthru
      _
  $region6: #{up_block_forward.1} parent=0 // loop_footer
    %s21 = sadd.s32 1, %s17
  $region7: #{up_block_forward.1} parent=0 // loop_footer_branch
    %16 = sbr.rel target = $region3
  $region8: #{up_block_forward.1} parent=0 // loop_exit
    _

</llo_original>
